<compile_context>
chip_gen: v6e
topology: v6e:2x2x1
jax: 0.10.0
libtpu: 0.0.40
codegen_flags: <defaults>
</compile_context>

<pallas_src>
import jax
import jax.numpy as jnp
from jax.experimental import pallas as pl
from jax.experimental.pallas import tpu as pltpu

# conf.* constants from the original module, chosen small.
WINDOW_GIVEN = 16
WINDOW_PREDICT = 8
N_HIDDENS = 32
N_FEATURES = 4
BATCH = 2

# ---- packed weight-slab layout (rows x 128 lanes, all block starts multiples of 8) ----
SLAB_LANES = 128
R_WIH = 0      # (H, 4H)  = (32, 128)
R_WHH = 32     # (H, 4H)  = (32, 128)
R_BIAS = 64    # 8-row bias block: row0 = b_ih+b_hh (1,128), row1 = extend_b (1,32),
               #                   row2 = attn_b (1,16), row3 = comb_b (1,32), row4 = out_b (1,4)
R_WCX = 72     # (H, H)   = (32, 32)   comb weight acting on inp
R_WCA = 104    # (H, H)   = (32, 32)   comb weight acting on attn_applied
R_WAX = 136    # (H, WG)  = (32, 16)   attn weight acting on inp
R_WAC = 168    # (H, WG)  = (32, 16)   attn weight acting on fixed context
R_WE = 200     # (F, H)   = (4, 32)    extend weight
R_WO = 208     # (H, F)   = (32, 4)    output weight
SLAB_ROWS = 240


def attention_decoder_kernel(enc_ref, ctx_ref, pred_ref, w_ref, out_ref):
    B, WG, H = enc_ref.shape          # (2, 16, 32)
    WP = pred_ref.shape[0] // B       # 8   (pred is flattened batch-major: (B*WP, F))
    F = pred_ref.shape[1]             # 4

    def dot(a, b):
        return jnp.dot(a, b, preferred_element_type=jnp.float32)

    # ---- static slices of the packed weight slab (loaded once, off the hot path) ----
    wih = w_ref[R_WIH:R_WIH + H, :]                    # (32, 128)
    whh = w_ref[R_WHH:R_WHH + H, :]                    # (32, 128)
    bias_blk = w_ref[R_BIAS:R_BIAS + 8, :]             # (8, 128) one vreg with all small biases
    b_lstm = bias_blk[0:1, :]                          # (1, 128)  b_ih + b_hh (fused)
    be = bias_blk[1:2, 0:H]                            # (1, 32)
    ba = bias_blk[2:3, 0:WG]                           # (1, 16)
    bc = bias_blk[3:4, 0:H]                            # (1, 32)
    bo = bias_blk[4:5, 0:F]                            # (1, 4)
    wcx = w_ref[R_WCX:R_WCX + H, 0:H]                  # (32, 32)
    wca = w_ref[R_WCA:R_WCA + H, 0:H]                  # (32, 32)
    wax = w_ref[R_WAX:R_WAX + H, 0:WG]                 # (32, 16)
    wac = w_ref[R_WAC:R_WAC + H, 0:WG]                 # (32, 16)
    we = w_ref[R_WE:R_WE + F, 0:H]                     # (4, 32)
    wo = w_ref[R_WO:R_WO + H, 0:F]                     # (32, 4)

    ctx = ctx_ref[...]                                 # (B, H) fixed context (also h_0)

    # ------------- hoisted precompute, stacked across batch (independent of h, c) -------------
    inp = dot(pred_ref[...], we) + be                  # (B*WP, H)  extend(predict[:, t]) for all t

    ctx_attn = dot(ctx, wac) + ba                      # (B, WG) loop-invariant ctx half, bias folded
    ctx_rows = jnp.concatenate(
        [jnp.broadcast_to(ctx_attn[b:b + 1, :], (WP, WG)) for b in range(B)], axis=0)  # (B*WP, WG)
    logits = dot(inp, wax) + ctx_rows                  # (B*WP, WG)
    logits = logits - jnp.max(logits, axis=-1, keepdims=True)
    e = jnp.exp(logits)
    aw = e / jnp.sum(e, axis=-1, keepdims=True)        # softmax(dim=1), exact & off the serial chain

    # per-batch attention bmm on the MXU; sublane-concat the (WP, H) results (tile-aligned)
    aa = jnp.concatenate(
        [dot(aw[b * WP:(b + 1) * WP, :], enc_ref[b]) for b in range(B)], axis=0)        # (B*WP, H)

    comb = jnp.maximum(dot(inp, wcx) + dot(aa, wca) + bc, 0.0)   # attn_combine + ReLU  (B*WP, H)
    gx = dot(comb, wih) + b_lstm                                 # (B*WP, 4H) x-path gates, fused bias

    # per-step (B, 4H) gate tiles (rows t and WP+t of the batch-major gx) — still h/c independent
    g_steps = [jnp.concatenate([gx[t:t + 1, :], gx[WP + t:WP + t + 1, :]], axis=0)
               for t in range(WP)]                               # WP x (B, 4H)

    # ------------- serial recurrence: one (B,H)@(H,4H) matmul + 2 whole-tile EUP ops / step -------------
    h = ctx                                            # h_0 = context               (B, H)
    c = jnp.zeros((B, H), jnp.float32)                 # init_cell_state             (B, H)
    # TODO(synk): hold whh in the MXU via pltpu.matmul_push_rhs/acc_lhs/pop if the bundle dump
    # shows the RHS being re-pushed every unrolled step.
    for t in range(WP):                                # fully unrolled (static trip count)
        gates = g_steps[t] + dot(h, whh)               # (B, 4H)
        sig = jax.nn.sigmoid(gates)                    # one EUP pass over the whole (2,128) tile
        th = jnp.tanh(gates)                           # one EUP pass
        i_g = sig[:, 0 * H:1 * H]                      # PyTorch LSTMCell gate order i, f, g, o
        f_g = sig[:, 1 * H:2 * H]
        g_g = th[:, 2 * H:3 * H]
        o_g = sig[:, 3 * H:4 * H]
        c = f_g * c + i_g * g_g
        h = o_g * jnp.tanh(c)

    # return self.out(h_i) — single stacked matmul + one store
    out_ref[...] = dot(h, wo) + bo


def prepare_params(params):
    """One-time weight prep: transposes, concat-Linear splits, bias fusion, and packing of all
    13 tensors into a single (240, 128) f32 slab (one prologue DMA instead of 13)."""
    H = params['extend_w'].shape[0]
    slab = jnp.zeros((SLAB_ROWS, SLAB_LANES), jnp.float32)

    def put(s, row, mat):
        r, c = mat.shape
        return s.at[row:row + r, 0:c].set(mat.astype(jnp.float32))

    slab = put(slab, R_WIH, params['lstm_w_ih'].T)                                   # (32, 128)
    slab = put(slab, R_WHH, params['lstm_w_hh'].T)                                   # (32, 128)
    slab = put(slab, R_BIAS + 0, (params['lstm_b_ih'] + params['lstm_b_hh'])[None])  # (1, 128)
    slab = put(slab, R_BIAS + 1, params['extend_b'][None])                           # (1, 32)
    slab = put(slab, R_BIAS + 2, params['attn_b'][None])                             # (1, 16)
    slab = put(slab, R_BIAS + 3, params['comb_b'][None])                             # (1, 32)
    slab = put(slab, R_BIAS + 4, params['out_b'][None])                              # (1, 4)
    slab = put(slab, R_WCX, params['comb_w'][:, :H].T)                               # (32, 32)
    slab = put(slab, R_WCA, params['comb_w'][:, H:].T)                               # (32, 32)
    slab = put(slab, R_WAX, params['attn_w'][:, :H].T)                               # (32, 16)
    slab = put(slab, R_WAC, params['attn_w'][:, H:].T)                               # (32, 16)
    slab = put(slab, R_WE, params['extend_w'].T)                                     # (4, 32)
    slab = put(slab, R_WO, params['out_w'].T)                                        # (32, 4)
    return slab


def attention_decoder(encoder_outs, context, predict, w_slab):
    B, WG, H = encoder_outs.shape
    WP, F = predict.shape[1], predict.shape[2]
    pred_flat = predict.reshape(B * WP, F)             # batch-major flatten (free, outside kernel)

    vmem = pl.BlockSpec(memory_space=pltpu.MemorySpace.VMEM)
    # No grid: the entire working set (~130 KB incl. the packed slab) is VMEM-resident on every
    # generation (v5e/v6e 128 MiB, v7x 64 MiB); a grid would only add per-step overhead at B=2.
    return pl.pallas_call(
        attention_decoder_kernel,
        out_shape=jax.ShapeDtypeStruct((B, F), jnp.float32),
        in_specs=[vmem, vmem, vmem, vmem],
        out_specs=vmem,
    )(encoder_outs, context, pred_flat, w_slab)


def reference(encoder_outs, context, predict, params):
    """Pure-JAX reproduction of the PyTorch forward (for correctness check)."""
    H = context.shape[1]
    h = context
    c = jnp.zeros_like(context)
    pred_t = jnp.transpose(predict, (1, 0, 2))
    for idx in range(pred_t.shape[0]):
        inp = pred_t[idx] @ params['extend_w'].T + params['extend_b']
        cat1 = jnp.concatenate([inp, context], axis=1)
        attn_w = jax.nn.softmax(cat1 @ params['attn_w'].T + params['attn_b'], axis=1)
        attn_applied = jnp.einsum('bw,bwh->bh', attn_w, encoder_outs)
        cat2 = jnp.concatenate([inp, attn_applied], axis=1)
        comb = jax.nn.relu(cat2 @ params['comb_w'].T + params['comb_b'])
        gates = (comb @ params['lstm_w_ih'].T + params['lstm_b_ih']
                 + h @ params['lstm_w_hh'].T + params['lstm_b_hh'])
        i_g = jax.nn.sigmoid(gates[:, :H])
        f_g = jax.nn.sigmoid(gates[:, H:2 * H])
        g_g = jnp.tanh(gates[:, 2 * H:3 * H])
        o_g = jax.nn.sigmoid(gates[:, 3 * H:])
        c = f_g * c + i_g * g_g
        h = o_g * jnp.tanh(c)
    return h @ params['out_w'].T + params['out_b']


def make_params(key, n_hiddens, n_features, window_given):
    H, F, WG = n_hiddens, n_features, window_given
    ks = jax.random.split(key, 12)
    u = lambda k, shape: jax.random.uniform(k, shape, jnp.float32, -0.1, 0.1)
    return {
        'extend_w':  u(ks[0], (H, F)),        # nn.Linear(n_features, n_hiddens)
        'extend_b':  u(ks[1], (H,)),
        'attn_w':    u(ks[2], (WG, 2 * H)),   # nn.Linear(2H, WINDOW_GIVEN)
        'attn_b':    u(ks[3], (WG,)),
        'comb_w':    u(ks[4], (H, 2 * H)),    # nn.Linear(2H, H)
        'comb_b':    u(ks[5], (H,)),
        'lstm_w_ih': u(ks[6], (4 * H, H)),    # nn.LSTMCell(H, H)
        'lstm_b_ih': u(ks[7], (4 * H,)),
        'lstm_w_hh': u(ks[8], (4 * H, H)),
        'lstm_b_hh': u(ks[9], (4 * H,)),
        'out_w':     u(ks[10], (F, H)),       # nn.Linear(H, n_features)
        'out_b':     u(ks[11], (F,)),
    }


if __name__ == "__main__":
    key = jax.random.PRNGKey(0)
    k_enc, k_ctx, k_pred, k_par = jax.random.split(key, 4)

    encoder_outs = jax.random.normal(k_enc, (BATCH, WINDOW_GIVEN, N_HIDDENS), jnp.float32)
    context = jax.random.normal(k_ctx, (BATCH, N_HIDDENS), jnp.float32)
    predict = jax.random.normal(k_pred, (BATCH, WINDOW_PREDICT, N_FEATURES), jnp.float32)
    params = make_params(k_par, N_HIDDENS, N_FEATURES, WINDOW_GIVEN)

    w_slab = prepare_params(params)          # one-time weight packing (outside per-call path)

    out = attention_decoder(encoder_outs, context, predict, w_slab)
    out = jax.block_until_ready(out)

    ref = reference(encoder_outs, context, predict, params)
    assert out.shape == (BATCH, N_FEATURES)
    assert jnp.allclose(out, ref, atol=1e-5, rtol=1e-5), (out, ref)
    print("KERNEL_OK")
</pallas_src>

<mosaic_0001>
module attributes {stable_mosaic.version = 11 : i64} {
  func.func @attention_decoder_kernel(%arg0: memref<2x16x32xf32, #tpu.memory_space<vmem>>, %arg1: memref<2x32xf32, #tpu.memory_space<vmem>>, %arg2: memref<16x4xf32, #tpu.memory_space<vmem>>, %arg3: memref<240x128xf32, #tpu.memory_space<vmem>>, %arg4: memref<2x4xf32, #tpu.memory_space<vmem>>) attributes {dimension_semantics = [], scalar_prefetch = 0 : i64, scratch_operands = 0 : i64, tpu.core_type = #tpu.core_type<tc>} {
    %c0 = arith.constant 0 : index
    %c0_0 = arith.constant 0 : index
    %0 = vector.load %arg3[%c0, %c0_0] : memref<240x128xf32, #tpu.memory_space<vmem>>, vector<32x128xf32>
    %c32 = arith.constant 32 : index
    %c0_1 = arith.constant 0 : index
    %1 = vector.load %arg3[%c32, %c0_1] : memref<240x128xf32, #tpu.memory_space<vmem>>, vector<32x128xf32>
    %c64 = arith.constant 64 : index
    %c0_2 = arith.constant 0 : index
    %2 = vector.load %arg3[%c64, %c0_2] : memref<240x128xf32, #tpu.memory_space<vmem>>, vector<8x128xf32>
    %3 = vector.extract_strided_slice %2 {offsets = [0, 0], sizes = [1, 128], strides = [1, 1]} : vector<8x128xf32> to vector<1x128xf32>
    %4 = vector.extract_strided_slice %2 {offsets = [1, 0], sizes = [1, 32], strides = [1, 1]} : vector<8x128xf32> to vector<1x32xf32>
    %5 = vector.extract_strided_slice %2 {offsets = [2, 0], sizes = [1, 16], strides = [1, 1]} : vector<8x128xf32> to vector<1x16xf32>
    %6 = vector.extract_strided_slice %2 {offsets = [3, 0], sizes = [1, 32], strides = [1, 1]} : vector<8x128xf32> to vector<1x32xf32>
    %7 = vector.extract_strided_slice %2 {offsets = [4, 0], sizes = [1, 4], strides = [1, 1]} : vector<8x128xf32> to vector<1x4xf32>
    %c72 = arith.constant 72 : index
    %c0_3 = arith.constant 0 : index
    %8 = vector.load %arg3[%c72, %c0_3] : memref<240x128xf32, #tpu.memory_space<vmem>>, vector<32x32xf32>
    %c104 = arith.constant 104 : index
    %c0_4 = arith.constant 0 : index
    %9 = vector.load %arg3[%c104, %c0_4] : memref<240x128xf32, #tpu.memory_space<vmem>>, vector<32x32xf32>
    %c136 = arith.constant 136 : index
    %c0_5 = arith.constant 0 : index
    %10 = vector.load %arg3[%c136, %c0_5] : memref<240x128xf32, #tpu.memory_space<vmem>>, vector<32x16xf32>
    %c168 = arith.constant 168 : index
    %c0_6 = arith.constant 0 : index
    %11 = vector.load %arg3[%c168, %c0_6] : memref<240x128xf32, #tpu.memory_space<vmem>>, vector<32x16xf32>
    %c200 = arith.constant 200 : index
    %c0_7 = arith.constant 0 : index
    %12 = vector.load %arg3[%c200, %c0_7] : memref<240x128xf32, #tpu.memory_space<vmem>>, vector<4x32xf32>
    %c208 = arith.constant 208 : index
    %c0_8 = arith.constant 0 : index
    %13 = vector.load %arg3[%c208, %c0_8] : memref<240x128xf32, #tpu.memory_space<vmem>>, vector<32x4xf32>
    %c0_9 = arith.constant 0 : index
    %c0_10 = arith.constant 0 : index
    %14 = vector.load %arg1[%c0_9, %c0_10] : memref<2x32xf32, #tpu.memory_space<vmem>>, vector<2x32xf32>
    %c0_11 = arith.constant 0 : index
    %c0_12 = arith.constant 0 : index
    %15 = vector.load %arg2[%c0_11, %c0_12] : memref<16x4xf32, #tpu.memory_space<vmem>>, vector<16x4xf32>
    %cst = arith.constant dense<0.000000e+00> : vector<16x32xf32>
    %16 = tpu.matmul %15, %12, %cst {dimension_numbers = #tpu.dot_dimension_numbers<[1], [0], [0], [1], [0, 0, 1, 1], [], []>} : vector<16x4xf32>, vector<4x32xf32>, vector<16x32xf32> -> vector<16x32xf32>
    %17 = vector.broadcast %4 : vector<1x32xf32> to vector<16x32xf32>
    %18 = arith.addf %16, %17 : vector<16x32xf32>
    %cst_13 = arith.constant dense<0.000000e+00> : vector<2x16xf32>
    %19 = tpu.matmul %14, %11, %cst_13 {dimension_numbers = #tpu.dot_dimension_numbers<[1], [0], [0], [1], [0, 0, 1, 1], [], []>} : vector<2x32xf32>, vector<32x16xf32>, vector<2x16xf32> -> vector<2x16xf32>
    %20 = vector.broadcast %5 : vector<1x16xf32> to vector<2x16xf32>
    %21 = arith.addf %19, %20 : vector<2x16xf32>
    %22 = vector.extract_strided_slice %21 {offsets = [0, 0], sizes = [1, 16], strides = [1, 1]} : vector<2x16xf32> to vector<1x16xf32>
    %23 = vector.shape_cast %22 : vector<1x16xf32> to vector<1x16xf32>
    %24 = vector.broadcast %23 : vector<1x16xf32> to vector<8x16xf32>
    %25 = vector.extract_strided_slice %21 {offsets = [1, 0], sizes = [1, 16], strides = [1, 1]} : vector<2x16xf32> to vector<1x16xf32>
    %26 = vector.shape_cast %25 : vector<1x16xf32> to vector<1x16xf32>
    %27 = vector.broadcast %26 : vector<1x16xf32> to vector<8x16xf32>
    %28 = tpu.concatenate %24, %27 in 0 : vector<8x16xf32>, vector<8x16xf32> -> vector<16x16xf32>
    %cst_14 = arith.constant dense<0.000000e+00> : vector<16x16xf32>
    %29 = tpu.matmul %18, %10, %cst_14 {dimension_numbers = #tpu.dot_dimension_numbers<[1], [0], [0], [1], [0, 0, 1, 1], [], []>} : vector<16x32xf32>, vector<32x16xf32>, vector<16x16xf32> -> vector<16x16xf32>
    %30 = arith.addf %29, %28 : vector<16x16xf32>
    %cst_15 = arith.constant dense<0xFF800000> : vector<16xf32>
    %31 = vector.multi_reduction <maximumf>, %30, %cst_15 [1] : vector<16x16xf32> to vector<16xf32>
    %32 = vector.shape_cast %31 : vector<16xf32> to vector<16x1xf32>
    %33 = vector.broadcast %32 : vector<16x1xf32> to vector<16x16xf32>
    %34 = arith.subf %30, %33 : vector<16x16xf32>
    %35 = math.exp %34 : vector<16x16xf32>
    %cst_16 = arith.constant dense<0.000000e+00> : vector<16xf32>
    %36 = vector.multi_reduction <add>, %35, %cst_16 [1] : vector<16x16xf32> to vector<16xf32>
    %37 = vector.shape_cast %36 : vector<16xf32> to vector<16x1xf32>
    %38 = vector.broadcast %37 : vector<16x1xf32> to vector<16x16xf32>
    %39 = arith.divf %35, %38 : vector<16x16xf32>
    %40 = vector.extract_strided_slice %39 {offsets = [0, 0], sizes = [8, 16], strides = [1, 1]} : vector<16x16xf32> to vector<8x16xf32>
    %c0_17 = arith.constant 0 : index
    %c0_18 = arith.constant 0 : index
    %c0_19 = arith.constant 0 : index
    %41 = vector.load %arg0[%c0_17, %c0_18, %c0_19] : memref<2x16x32xf32, #tpu.memory_space<vmem>>, vector<1x16x32xf32>
    %42 = vector.shape_cast %41 : vector<1x16x32xf32> to vector<16x32xf32>
    %cst_20 = arith.constant dense<0.000000e+00> : vector<8x32xf32>
    %43 = tpu.matmul %40, %42, %cst_20 {dimension_numbers = #tpu.dot_dimension_numbers<[1], [0], [0], [1], [0, 0, 1, 1], [], []>} : vector<8x16xf32>, vector<16x32xf32>, vector<8x32xf32> -> vector<8x32xf32>
    %44 = vector.extract_strided_slice %39 {offsets = [8, 0], sizes = [8, 16], strides = [1, 1]} : vector<16x16xf32> to vector<8x16xf32>
    %c1 = arith.constant 1 : index
    %c0_21 = arith.constant 0 : index
    %c0_22 = arith.constant 0 : index
    %45 = vector.load %arg0[%c1, %c0_21, %c0_22] : memref<2x16x32xf32, #tpu.memory_space<vmem>>, vector<1x16x32xf32>
    %46 = vector.shape_cast %45 : vector<1x16x32xf32> to vector<16x32xf32>
    %cst_23 = arith.constant dense<0.000000e+00> : vector<8x32xf32>
    %47 = tpu.matmul %44, %46, %cst_23 {dimension_numbers = #tpu.dot_dimension_numbers<[1], [0], [0], [1], [0, 0, 1, 1], [], []>} : vector<8x16xf32>, vector<16x32xf32>, vector<8x32xf32> -> vector<8x32xf32>
    %48 = tpu.concatenate %43, %47 in 0 : vector<8x32xf32>, vector<8x32xf32> -> vector<16x32xf32>
    %cst_24 = arith.constant dense<0.000000e+00> : vector<16x32xf32>
    %49 = tpu.matmul %18, %8, %cst_24 {dimension_numbers = #tpu.dot_dimension_numbers<[1], [0], [0], [1], [0, 0, 1, 1], [], []>} : vector<16x32xf32>, vector<32x32xf32>, vector<16x32xf32> -> vector<16x32xf32>
    %cst_25 = arith.constant dense<0.000000e+00> : vector<16x32xf32>
    %50 = tpu.matmul %48, %9, %cst_25 {dimension_numbers = #tpu.dot_dimension_numbers<[1], [0], [0], [1], [0, 0, 1, 1], [], []>} : vector<16x32xf32>, vector<32x32xf32>, vector<16x32xf32> -> vector<16x32xf32>
    %51 = arith.addf %49, %50 : vector<16x32xf32>
    %52 = vector.broadcast %6 : vector<1x32xf32> to vector<16x32xf32>
    %53 = arith.addf %51, %52 : vector<16x32xf32>
    %cst_26 = arith.constant 0.000000e+00 : f32
    %54 = vector.broadcast %cst_26 : f32 to vector<16x32xf32>
    %55 = arith.maximumf %53, %54 : vector<16x32xf32>
    %cst_27 = arith.constant dense<0.000000e+00> : vector<16x128xf32>
    %56 = tpu.matmul %55, %0, %cst_27 {dimension_numbers = #tpu.dot_dimension_numbers<[1], [0], [0], [1], [0, 0, 1, 1], [], []>} : vector<16x32xf32>, vector<32x128xf32>, vector<16x128xf32> -> vector<16x128xf32>
    %57 = vector.broadcast %3 : vector<1x128xf32> to vector<16x128xf32>
    %58 = arith.addf %56, %57 : vector<16x128xf32>
    %59 = vector.extract_strided_slice %58 {offsets = [0, 0], sizes = [1, 128], strides = [1, 1]} : vector<16x128xf32> to vector<1x128xf32>
    %60 = vector.extract_strided_slice %58 {offsets = [8, 0], sizes = [1, 128], strides = [1, 1]} : vector<16x128xf32> to vector<1x128xf32>
    %61 = tpu.concatenate %59, %60 in 0 : vector<1x128xf32>, vector<1x128xf32> -> vector<2x128xf32>
    %62 = vector.extract_strided_slice %58 {offsets = [1, 0], sizes = [1, 128], strides = [1, 1]} : vector<16x128xf32> to vector<1x128xf32>
    %63 = vector.extract_strided_slice %58 {offsets = [9, 0], sizes = [1, 128], strides = [1, 1]} : vector<16x128xf32> to vector<1x128xf32>
    %64 = tpu.concatenate %62, %63 in 0 : vector<1x128xf32>, vector<1x128xf32> -> vector<2x128xf32>
    %65 = vector.extract_strided_slice %58 {offsets = [2, 0], sizes = [1, 128], strides = [1, 1]} : vector<16x128xf32> to vector<1x128xf32>
    %66 = vector.extract_strided_slice %58 {offsets = [10, 0], sizes = [1, 128], strides = [1, 1]} : vector<16x128xf32> to vector<1x128xf32>
    %67 = tpu.concatenate %65, %66 in 0 : vector<1x128xf32>, vector<1x128xf32> -> vector<2x128xf32>
    %68 = vector.extract_strided_slice %58 {offsets = [3, 0], sizes = [1, 128], strides = [1, 1]} : vector<16x128xf32> to vector<1x128xf32>
    %69 = vector.extract_strided_slice %58 {offsets = [11, 0], sizes = [1, 128], strides = [1, 1]} : vector<16x128xf32> to vector<1x128xf32>
    %70 = tpu.concatenate %68, %69 in 0 : vector<1x128xf32>, vector<1x128xf32> -> vector<2x128xf32>
    %71 = vector.extract_strided_slice %58 {offsets = [4, 0], sizes = [1, 128], strides = [1, 1]} : vector<16x128xf32> to vector<1x128xf32>
    %72 = vector.extract_strided_slice %58 {offsets = [12, 0], sizes = [1, 128], strides = [1, 1]} : vector<16x128xf32> to vector<1x128xf32>
    %73 = tpu.concatenate %71, %72 in 0 : vector<1x128xf32>, vector<1x128xf32> -> vector<2x128xf32>
    %74 = vector.extract_strided_slice %58 {offsets = [5, 0], sizes = [1, 128], strides = [1, 1]} : vector<16x128xf32> to vector<1x128xf32>
    %75 = vector.extract_strided_slice %58 {offsets = [13, 0], sizes = [1, 128], strides = [1, 1]} : vector<16x128xf32> to vector<1x128xf32>
    %76 = tpu.concatenate %74, %75 in 0 : vector<1x128xf32>, vector<1x128xf32> -> vector<2x128xf32>
    %77 = vector.extract_strided_slice %58 {offsets = [6, 0], sizes = [1, 128], strides = [1, 1]} : vector<16x128xf32> to vector<1x128xf32>
    %78 = vector.extract_strided_slice %58 {offsets = [14, 0], sizes = [1, 128], strides = [1, 1]} : vector<16x128xf32> to vector<1x128xf32>
    %79 = tpu.concatenate %77, %78 in 0 : vector<1x128xf32>, vector<1x128xf32> -> vector<2x128xf32>
    %80 = vector.extract_strided_slice %58 {offsets = [7, 0], sizes = [1, 128], strides = [1, 1]} : vector<16x128xf32> to vector<1x128xf32>
    %81 = vector.extract_strided_slice %58 {offsets = [15, 0], sizes = [1, 128], strides = [1, 1]} : vector<16x128xf32> to vector<1x128xf32>
    %82 = tpu.concatenate %80, %81 in 0 : vector<1x128xf32>, vector<1x128xf32> -> vector<2x128xf32>
    %cst_28 = arith.constant 0.000000e+00 : f32
    %83 = vector.broadcast %cst_28 : f32 to vector<2x32xf32>
    %cst_29 = arith.constant dense<0.000000e+00> : vector<2x128xf32>
    %84 = tpu.matmul %14, %1, %cst_29 {dimension_numbers = #tpu.dot_dimension_numbers<[1], [0], [0], [1], [0, 0, 1, 1], [], []>} : vector<2x32xf32>, vector<32x128xf32>, vector<2x128xf32> -> vector<2x128xf32>
    %85 = arith.addf %61, %84 : vector<2x128xf32>
    %86 = arith.negf %85 : vector<2x128xf32>
    %87 = math.exp %86 : vector<2x128xf32>
    %cst_30 = arith.constant 1.000000e+00 : f32
    %88 = vector.broadcast %cst_30 : f32 to vector<2x128xf32>
    %89 = arith.addf %88, %87 : vector<2x128xf32>
    %90 = arith.divf %88, %89 : vector<2x128xf32>
    %91 = math.tanh %85 : vector<2x128xf32>
    %92 = vector.extract_strided_slice %90 {offsets = [0, 0], sizes = [2, 32], strides = [1, 1]} : vector<2x128xf32> to vector<2x32xf32>
    %93 = vector.extract_strided_slice %90 {offsets = [0, 32], sizes = [2, 32], strides = [1, 1]} : vector<2x128xf32> to vector<2x32xf32>
    %94 = vector.extract_strided_slice %91 {offsets = [0, 64], sizes = [2, 32], strides = [1, 1]} : vector<2x128xf32> to vector<2x32xf32>
    %95 = vector.extract_strided_slice %90 {offsets = [0, 96], sizes = [2, 32], strides = [1, 1]} : vector<2x128xf32> to vector<2x32xf32>
    %96 = arith.mulf %93, %83 : vector<2x32xf32>
    %97 = arith.mulf %92, %94 : vector<2x32xf32>
    %98 = arith.addf %96, %97 : vector<2x32xf32>
    %99 = math.tanh %98 : vector<2x32xf32>
    %100 = arith.mulf %95, %99 : vector<2x32xf32>
    %cst_31 = arith.constant dense<0.000000e+00> : vector<2x128xf32>
    %101 = tpu.matmul %100, %1, %cst_31 {dimension_numbers = #tpu.dot_dimension_numbers<[1], [0], [0], [1], [0, 0, 1, 1], [], []>} : vector<2x32xf32>, vector<32x128xf32>, vector<2x128xf32> -> vector<2x128xf32>
    %102 = arith.addf %64, %101 : vector<2x128xf32>
    %103 = arith.negf %102 : vector<2x128xf32>
    %104 = math.exp %103 : vector<2x128xf32>
    %cst_32 = arith.constant 1.000000e+00 : f32
    %105 = vector.broadcast %cst_32 : f32 to vector<2x128xf32>
    %106 = arith.addf %105, %104 : vector<2x128xf32>
    %107 = arith.divf %105, %106 : vector<2x128xf32>
    %108 = math.tanh %102 : vector<2x128xf32>
    %109 = vector.extract_strided_slice %107 {offsets = [0, 0], sizes = [2, 32], strides = [1, 1]} : vector<2x128xf32> to vector<2x32xf32>
    %110 = vector.extract_strided_slice %107 {offsets = [0, 32], sizes = [2, 32], strides = [1, 1]} : vector<2x128xf32> to vector<2x32xf32>
    %111 = vector.extract_strided_slice %108 {offsets = [0, 64], sizes = [2, 32], strides = [1, 1]} : vector<2x128xf32> to vector<2x32xf32>
    %112 = vector.extract_strided_slice %107 {offsets = [0, 96], sizes = [2, 32], strides = [1, 1]} : vector<2x128xf32> to vector<2x32xf32>
    %113 = arith.mulf %110, %98 : vector<2x32xf32>
    %114 = arith.mulf %109, %111 : vector<2x32xf32>
    %115 = arith.addf %113, %114 : vector<2x32xf32>
    %116 = math.tanh %115 : vector<2x32xf32>
    %117 = arith.mulf %112, %116 : vector<2x32xf32>
    %cst_33 = arith.constant dense<0.000000e+00> : vector<2x128xf32>
    %118 = tpu.matmul %117, %1, %cst_33 {dimension_numbers = #tpu.dot_dimension_numbers<[1], [0], [0], [1], [0, 0, 1, 1], [], []>} : vector<2x32xf32>, vector<32x128xf32>, vector<2x128xf32> -> vector<2x128xf32>
    %119 = arith.addf %67, %118 : vector<2x128xf32>
    %120 = arith.negf %119 : vector<2x128xf32>
    %121 = math.exp %120 : vector<2x128xf32>
    %cst_34 = arith.constant 1.000000e+00 : f32
    %122 = vector.broadcast %cst_34 : f32 to vector<2x128xf32>
    %123 = arith.addf %122, %121 : vector<2x128xf32>
    %124 = arith.divf %122, %123 : vector<2x128xf32>
    %125 = math.tanh %119 : vector<2x128xf32>
    %126 = vector.extract_strided_slice %124 {offsets = [0, 0], sizes = [2, 32], strides = [1, 1]} : vector<2x128xf32> to vector<2x32xf32>
    %127 = vector.extract_strided_slice %124 {offsets = [0, 32], sizes = [2, 32], strides = [1, 1]} : vector<2x128xf32> to vector<2x32xf32>
    %128 = vector.extract_strided_slice %125 {offsets = [0, 64], sizes = [2, 32], strides = [1, 1]} : vector<2x128xf32> to vector<2x32xf32>
    %129 = vector.extract_strided_slice %124 {offsets = [0, 96], sizes = [2, 32], strides = [1, 1]} : vector<2x128xf32> to vector<2x32xf32>
    %130 = arith.mulf %127, %115 : vector<2x32xf32>
    %131 = arith.mulf %126, %128 : vector<2x32xf32>
    %132 = arith.addf %130, %131 : vector<2x32xf32>
    %133 = math.tanh %132 : vector<2x32xf32>
    %134 = arith.mulf %129, %133 : vector<2x32xf32>
    %cst_35 = arith.constant dense<0.000000e+00> : vector<2x128xf32>
    %135 = tpu.matmul %134, %1, %cst_35 {dimension_numbers = #tpu.dot_dimension_numbers<[1], [0], [0], [1], [0, 0, 1, 1], [], []>} : vector<2x32xf32>, vector<32x128xf32>, vector<2x128xf32> -> vector<2x128xf32>
    %136 = arith.addf %70, %135 : vector<2x128xf32>
    %137 = arith.negf %136 : vector<2x128xf32>
    %138 = math.exp %137 : vector<2x128xf32>
    %cst_36 = arith.constant 1.000000e+00 : f32
    %139 = vector.broadcast %cst_36 : f32 to vector<2x128xf32>
    %140 = arith.addf %139, %138 : vector<2x128xf32>
    %141 = arith.divf %139, %140 : vector<2x128xf32>
    %142 = math.tanh %136 : vector<2x128xf32>
    %143 = vector.extract_strided_slice %141 {offsets = [0, 0], sizes = [2, 32], strides = [1, 1]} : vector<2x128xf32> to vector<2x32xf32>
    %144 = vector.extract_strided_slice %141 {offsets = [0, 32], sizes = [2, 32], strides = [1, 1]} : vector<2x128xf32> to vector<2x32xf32>
    %145 = vector.extract_strided_slice %142 {offsets = [0, 64], sizes = [2, 32], strides = [1, 1]} : vector<2x128xf32> to vector<2x32xf32>
    %146 = vector.extract_strided_slice %141 {offsets = [0, 96], sizes = [2, 32], strides = [1, 1]} : vector<2x128xf32> to vector<2x32xf32>
    %147 = arith.mulf %144, %132 : vector<2x32xf32>
    %148 = arith.mulf %143, %145 : vector<2x32xf32>
    %149 = arith.addf %147, %148 : vector<2x32xf32>
    %150 = math.tanh %149 : vector<2x32xf32>
    %151 = arith.mulf %146, %150 : vector<2x32xf32>
    %cst_37 = arith.constant dense<0.000000e+00> : vector<2x128xf32>
    %152 = tpu.matmul %151, %1, %cst_37 {dimension_numbers = #tpu.dot_dimension_numbers<[1], [0], [0], [1], [0, 0, 1, 1], [], []>} : vector<2x32xf32>, vector<32x128xf32>, vector<2x128xf32> -> vector<2x128xf32>
    %153 = arith.addf %73, %152 : vector<2x128xf32>
    %154 = arith.negf %153 : vector<2x128xf32>
    %155 = math.exp %154 : vector<2x128xf32>
    %cst_38 = arith.constant 1.000000e+00 : f32
    %156 = vector.broadcast %cst_38 : f32 to vector<2x128xf32>
    %157 = arith.addf %156, %155 : vector<2x128xf32>
    %158 = arith.divf %156, %157 : vector<2x128xf32>
    %159 = math.tanh %153 : vector<2x128xf32>
    %160 = vector.extract_strided_slice %158 {offsets = [0, 0], sizes = [2, 32], strides = [1, 1]} : vector<2x128xf32> to vector<2x32xf32>
    %161 = vector.extract_strided_slice %158 {offsets = [0, 32], sizes = [2, 32], strides = [1, 1]} : vector<2x128xf32> to vector<2x32xf32>
    %162 = vector.extract_strided_slice %159 {offsets = [0, 64], sizes = [2, 32], strides = [1, 1]} : vector<2x128xf32> to vector<2x32xf32>
    %163 = vector.extract_strided_slice %158 {offsets = [0, 96], sizes = [2, 32], strides = [1, 1]} : vector<2x128xf32> to vector<2x32xf32>
    %164 = arith.mulf %161, %149 : vector<2x32xf32>
    %165 = arith.mulf %160, %162 : vector<2x32xf32>
    %166 = arith.addf %164, %165 : vector<2x32xf32>
    %167 = math.tanh %166 : vector<2x32xf32>
    %168 = arith.mulf %163, %167 : vector<2x32xf32>
    %cst_39 = arith.constant dense<0.000000e+00> : vector<2x128xf32>
    %169 = tpu.matmul %168, %1, %cst_39 {dimension_numbers = #tpu.dot_dimension_numbers<[1], [0], [0], [1], [0, 0, 1, 1], [], []>} : vector<2x32xf32>, vector<32x128xf32>, vector<2x128xf32> -> vector<2x128xf32>
    %170 = arith.addf %76, %169 : vector<2x128xf32>
    %171 = arith.negf %170 : vector<2x128xf32>
    %172 = math.exp %171 : vector<2x128xf32>
    %cst_40 = arith.constant 1.000000e+00 : f32
    %173 = vector.broadcast %cst_40 : f32 to vector<2x128xf32>
    %174 = arith.addf %173, %172 : vector<2x128xf32>
    %175 = arith.divf %173, %174 : vector<2x128xf32>
    %176 = math.tanh %170 : vector<2x128xf32>
    %177 = vector.extract_strided_slice %175 {offsets = [0, 0], sizes = [2, 32], strides = [1, 1]} : vector<2x128xf32> to vector<2x32xf32>
    %178 = vector.extract_strided_slice %175 {offsets = [0, 32], sizes = [2, 32], strides = [1, 1]} : vector<2x128xf32> to vector<2x32xf32>
    %179 = vector.extract_strided_slice %176 {offsets = [0, 64], sizes = [2, 32], strides = [1, 1]} : vector<2x128xf32> to vector<2x32xf32>
    %180 = vector.extract_strided_slice %175 {offsets = [0, 96], sizes = [2, 32], strides = [1, 1]} : vector<2x128xf32> to vector<2x32xf32>
    %181 = arith.mulf %178, %166 : vector<2x32xf32>
    %182 = arith.mulf %177, %179 : vector<2x32xf32>
    %183 = arith.addf %181, %182 : vector<2x32xf32>
    %184 = math.tanh %183 : vector<2x32xf32>
    %185 = arith.mulf %180, %184 : vector<2x32xf32>
    %cst_41 = arith.constant dense<0.000000e+00> : vector<2x128xf32>
    %186 = tpu.matmul %185, %1, %cst_41 {dimension_numbers = #tpu.dot_dimension_numbers<[1], [0], [0], [1], [0, 0, 1, 1], [], []>} : vector<2x32xf32>, vector<32x128xf32>, vector<2x128xf32> -> vector<2x128xf32>
    %187 = arith.addf %79, %186 : vector<2x128xf32>
    %188 = arith.negf %187 : vector<2x128xf32>
    %189 = math.exp %188 : vector<2x128xf32>
    %cst_42 = arith.constant 1.000000e+00 : f32
    %190 = vector.broadcast %cst_42 : f32 to vector<2x128xf32>
    %191 = arith.addf %190, %189 : vector<2x128xf32>
    %192 = arith.divf %190, %191 : vector<2x128xf32>
    %193 = math.tanh %187 : vector<2x128xf32>
    %194 = vector.extract_strided_slice %192 {offsets = [0, 0], sizes = [2, 32], strides = [1, 1]} : vector<2x128xf32> to vector<2x32xf32>
    %195 = vector.extract_strided_slice %192 {offsets = [0, 32], sizes = [2, 32], strides = [1, 1]} : vector<2x128xf32> to vector<2x32xf32>
    %196 = vector.extract_strided_slice %193 {offsets = [0, 64], sizes = [2, 32], strides = [1, 1]} : vector<2x128xf32> to vector<2x32xf32>
    %197 = vector.extract_strided_slice %192 {offsets = [0, 96], sizes = [2, 32], strides = [1, 1]} : vector<2x128xf32> to vector<2x32xf32>
    %198 = arith.mulf %195, %183 : vector<2x32xf32>
    %199 = arith.mulf %194, %196 : vector<2x32xf32>
    %200 = arith.addf %198, %199 : vector<2x32xf32>
    %201 = math.tanh %200 : vector<2x32xf32>
    %202 = arith.mulf %197, %201 : vector<2x32xf32>
    %cst_43 = arith.constant dense<0.000000e+00> : vector<2x128xf32>
    %203 = tpu.matmul %202, %1, %cst_43 {dimension_numbers = #tpu.dot_dimension_numbers<[1], [0], [0], [1], [0, 0, 1, 1], [], []>} : vector<2x32xf32>, vector<32x128xf32>, vector<2x128xf32> -> vector<2x128xf32>
    %204 = arith.addf %82, %203 : vector<2x128xf32>
    %205 = arith.negf %204 : vector<2x128xf32>
    %206 = math.exp %205 : vector<2x128xf32>
    %cst_44 = arith.constant 1.000000e+00 : f32
    %207 = vector.broadcast %cst_44 : f32 to vector<2x128xf32>
    %208 = arith.addf %207, %206 : vector<2x128xf32>
    %209 = arith.divf %207, %208 : vector<2x128xf32>
    %210 = math.tanh %204 : vector<2x128xf32>
    %211 = vector.extract_strided_slice %209 {offsets = [0, 0], sizes = [2, 32], strides = [1, 1]} : vector<2x128xf32> to vector<2x32xf32>
    %212 = vector.extract_strided_slice %209 {offsets = [0, 32], sizes = [2, 32], strides = [1, 1]} : vector<2x128xf32> to vector<2x32xf32>
    %213 = vector.extract_strided_slice %210 {offsets = [0, 64], sizes = [2, 32], strides = [1, 1]} : vector<2x128xf32> to vector<2x32xf32>
    %214 = vector.extract_strided_slice %209 {offsets = [0, 96], sizes = [2, 32], strides = [1, 1]} : vector<2x128xf32> to vector<2x32xf32>
    %215 = arith.mulf %212, %200 : vector<2x32xf32>
    %216 = arith.mulf %211, %213 : vector<2x32xf32>
    %217 = arith.addf %215, %216 : vector<2x32xf32>
    %218 = math.tanh %217 : vector<2x32xf32>
    %219 = arith.mulf %214, %218 : vector<2x32xf32>
    %cst_45 = arith.constant dense<0.000000e+00> : vector<2x4xf32>
    %220 = tpu.matmul %219, %13, %cst_45 {dimension_numbers = #tpu.dot_dimension_numbers<[1], [0], [0], [1], [0, 0, 1, 1], [], []>} : vector<2x32xf32>, vector<32x4xf32>, vector<2x4xf32> -> vector<2x4xf32>
    %221 = vector.broadcast %7 : vector<1x4xf32> to vector<2x4xf32>
    %222 = arith.addf %220, %221 : vector<2x4xf32>
    %c0_46 = arith.constant 0 : index
    %c0_47 = arith.constant 0 : index
    %223 = vector.load %arg4[%c0_46, %c0_47] : memref<2x4xf32, #tpu.memory_space<vmem>>, vector<2x4xf32>
    tpu.vector_store %arg4[%c0_46, %c0_47], %222 {strides = array<i32>} : memref<2x4xf32, #tpu.memory_space<vmem>>, vector<2x4xf32>,
    return
  }
}

</mosaic_0001>

<llo_original>
// kernel: tpu_custom_call.1
$region0: #{tpu_custom_call.1}
  #allocation0 [shape = 'u32[]', space=smem, size = 0x4, offset = 0x4, fixed_abs, tag = 'smem constant byte address 0x4 - core index']
  #allocation1 [shape = 'u32[144,128]{1,0:T(1,128)}', space=vmem, size = 0x12000, scoped, tag = 'internal scratch']
  %s0 = inlined_call_operand.hbm [shape: f32[2,16,32], index: 0, kind: input, shape index: {}]
  %s1 = inlined_call_operand.vmem [shape: f32[2,32], index: 1, kind: input, shape index: {}]
  %s2 = inlined_call_operand.vmem [shape: f32[16,4], index: 2, kind: input, shape index: {}]
  %s3 = inlined_call_operand.hbm [shape: f32[240,128], index: 3, kind: input, shape index: {}]
  %s4 = inlined_call_operand.hbm [shape: f32[2,4], index: 4, kind: output, shape index: {}]
  %s5 = sld [smem:[#allocation0]]
  $region34: #{tpu_custom_call.1} parent=0
    _
  %s7 = ssub.s32 1, %s5
  %s8 = scalar_select 0, %s7, %s5
  $region1: #{tpu_custom_call.1} parent=0
    #allocation2 [shape = 'u8[16384]{0}', space=vmem, size = 0x4000, scoped, tag = 'input window, operand 0, single buffered']
    #allocation3 [shape = 's32[1]{0}', space=sflag, size = 0x4, scoped, tag = 'scoped memory for tpu_custom_call.1']
    #allocation4 [shape = 's32[1]{0}', space=sflag, size = 0x4, scoped, tag = 'scoped memory for tpu_custom_call.1']
    #allocation5 [shape = 'u8[122880]{0}', space=vmem, size = 0x1e000, scoped, tag = 'input window, operand 3, single buffered']
    #allocation6 [shape = 's32[1]{0}', space=sflag, size = 0x4, scoped, tag = 'scoped memory for tpu_custom_call.1']
    #allocation7 [shape = 'u8[1024]{0}', space=vmem, size = 0x400, scoped, tag = 'output window, operand 0, single buffered']
    %9 = vsyncpa [#allocation3], 0
    %10 = vsyncpa [#allocation6], 0
    %11 = vsyncpa [#allocation4], 0
    // Predicated region
    $region2: #{tpu_custom_call.1} parent=1 // pred_check
      _
    $region3: #{tpu_custom_call.1} parent=1 // pred_check_branch
      %13 = sbr.rel (0) target = $region5
    $region4: #{tpu_custom_call.1} parent=1 // pred_region
      %s15 = ssub.s32 512, 512
      %16 = vsyncadd [#allocation3], %s15
      %s17 = sshll.u32 [#allocation2], 4
      %s18 = int_to_ptr.vmem [resolvable:$true] %s17
      %23 = dma.hbm_to_vmem [thread:$0]  %s0, 512, %s18, [#allocation3], 128, 128, 8
    $region5: #{tpu_custom_call.1} parent=1 // pred_fallthru
      _
    // Predicated region
    $region6: #{tpu_custom_call.1} parent=1 // pred_check
      _
    $region7: #{tpu_custom_call.1} parent=1 // pred_check_branch
      %25 = sbr.rel (0) target = $region9
    $region8: #{tpu_custom_call.1} parent=1 // pred_region
      _
    $region9: #{tpu_custom_call.1} parent=1 // pred_fallthru
      _
    // Predicated region
    $region10: #{tpu_custom_call.1} parent=1 // pred_check
      _
    $region11: #{tpu_custom_call.1} parent=1 // pred_check_branch
      %27 = sbr.rel (0) target = $region13
    $region12: #{tpu_custom_call.1} parent=1 // pred_region
      _
    $region13: #{tpu_custom_call.1} parent=1 // pred_fallthru
      _
    // Predicated region
    $region14: #{tpu_custom_call.1} parent=1 // pred_check
      _
    $region15: #{tpu_custom_call.1} parent=1 // pred_check_branch
      %29 = sbr.rel (0) target = $region17
    $region16: #{tpu_custom_call.1} parent=1 // pred_region
      %s31 = ssub.s32 3840, 3840
      %32 = vsyncadd [#allocation6], %s31
      %s33 = sshll.u32 [#allocation5], 4
      %s34 = int_to_ptr.vmem [resolvable:$true] %s33
      %39 = dma.hbm_to_vmem [thread:$0]  %s3, 3840, %s34, [#allocation6], 128, 128, 8
    $region17: #{tpu_custom_call.1} parent=1 // pred_fallthru
      _
    // Predicated region
    $region18: #{tpu_custom_call.1} parent=1 // pred_check
      _
    $region19: #{tpu_custom_call.1} parent=1 // pred_check_branch
      %41 = sbr.rel (0) target = $region21
    $region20: #{tpu_custom_call.1} parent=1 // pred_region
      %42 = dma.done [#allocation3], 512
    $region21: #{tpu_custom_call.1} parent=1 // pred_fallthru
      _
    // Predicated region
    $region22: #{tpu_custom_call.1} parent=1 // pred_check
      _
    $region23: #{tpu_custom_call.1} parent=1 // pred_check_branch
      %44 = sbr.rel (0) target = $region25
    $region24: #{tpu_custom_call.1} parent=1 // pred_region
      %45 = dma.done [#allocation6], 3840
    $region25: #{tpu_custom_call.1} parent=1 // pred_fallthru
      _
    %v46 = vld [vmem:[#allocation5] sm:$0xff]
    %v47 = vld [vmem:[#allocation5 + $0x8] sm:$0xff]
    %v48 = vld [vmem:[#allocation5 + $0x10] sm:$0xff]
    %v49 = vld [vmem:[#allocation5 + $0x18] sm:$0xff]
    %v50 = vld [vmem:[#allocation5 + $0x20] sm:$0xff]
    %v51 = vld [vmem:[#allocation5 + $0x28] sm:$0xff]
    %v52 = vld [vmem:[#allocation5 + $0x30] sm:$0xff]
    %v53 = vld [vmem:[#allocation5 + $0x38] sm:$0xff]
    %v54 = vld [vmem:[#allocation5 + $0x40] sm:$0xff]
    %v55 = vld [vmem:[#allocation5 + $0x48] sm:$0xff]
    %v56 = vld [vmem:[#allocation5 + $0x50] sm:$0xff]
    %v57 = vld [vmem:[#allocation5 + $0x58] sm:$0xff]
    %v58 = vld [vmem:[#allocation5 + $0x60] sm:$0xff]
    %v59 = vld [vmem:[#allocation5 + $0x68] sm:$0xff]
    %v60 = vld [vmem:[#allocation5 + $0x70] sm:$0xff]
    %v61 = vld [vmem:[#allocation5 + $0x78] sm:$0xff]
    %v62 = vld [vmem:[#allocation5 + $0x80] sm:$0xff]
    %v63 = vld [vmem:[#allocation5 + $0x88] sm:$0xff]
    %v64 = vld [vmem:[#allocation5 + $0x90] sm:$0xff]
    %v65 = vld [vmem:[#allocation5 + $0x98] sm:$0xff]
    %v66 = vld [vmem:[#allocation5 + $0xa0] sm:$0xff]
    %v67 = vld [vmem:[#allocation5 + $0xa8] sm:$0xff]
    %v68 = vld [vmem:[#allocation5 + $0xb0] sm:$0xff]
    %v69 = vld [vmem:[#allocation5 + $0xb8] sm:$0xff]
    %v70 = vld [vmem:[#allocation5 + $0xc0] sm:$0xff]
    %v71 = vld [vmem:[#allocation5 + $0xc8] sm:$0xf]
    %v72 = vld [vmem:[#allocation5 + $0xd0] sm:$0xff]
    %v73 = vld [vmem:[#allocation5 + $0xd8] sm:$0xff]
    %v74 = vld [vmem:[#allocation5 + $0xe0] sm:$0xff]
    %v75 = vld [vmem:[#allocation5 + $0xe8] sm:$0xff]
    %v76 = vld [vmem:[%s1] sm:$0x3]
    %v77 = vld [vmem:[%s2] sm:$0xff]
    %v78 = vld [vmem:[%s2 + $0x8] sm:$0xff]
    %v79 = vlaneseq
    %v80 = vshrl.u32 %v79, 7
    %v81 = vsub.s32 1, %v80
    %v82 = vrot.slane %v54, %v81
    %vm83 = vcmask 31744
    %v85 = vsel %vm83, %v77, 0
    %v88 = vsel %vm83, %v78, 0
    %vm90 = vcmask 1043456
    %v92 = vsel %vm90, %v71, 0
    %94 = vmatprep.subr.mxu0 0.0
    %95 = vmatpush1.msra.mxu0 0.0
    %96 = vmatprep.subr.mxu0 0.0
    %97 = vmatpush1.msra.mxu0 0.0
    %98 = vmatprep.subr.mxu0 0.0
    %99 = vmatpush1.msra.mxu0 0.0
    %100 = vmatprep.subr.mxu0 0.0
    %101 = vmatpush1.msra.mxu0 0.0
    %102 = vmatprep.subr.mxu0 0.0
    %103 = vmatpush1.msra.mxu0 0.0
    %104 = vmatprep.subr.mxu0 0.0
    %105 = vmatpush1.msra.mxu0 0.0
    %106 = vmatprep.subr.mxu0 0.0
    %107 = vmatpush1.msra.mxu0 0.0
    %108 = vmatprep.subr.mxu0 0.0
    %109 = vmatpush1.msra.mxu0 0.0
    %110 = vmatprep.subr.mxu0 0.0
    %111 = vmatpush1.msra.mxu0 0.0
    %112 = vmatprep.subr.mxu0 0.0
    %113 = vmatpush1.msra.mxu0 0.0
    %114 = vmatprep.subr.mxu0 0.0
    %115 = vmatpush1.msra.mxu0 0.0
    %116 = vmatprep.subr.mxu0 0.0
    %117 = vmatpush1.msra.mxu0 0.0
    %118 = vmatprep.subr.mxu0 0.0
    %119 = vmatpush1.msra.mxu0 0.0
    %120 = vmatprep.subr.mxu0 0.0
    %121 = vmatpush1.msra.mxu0 0.0
    %122 = vmatprep.subr.mxu0 0.0
    %123 = vmatpush1.msra.mxu0 0.0
    %124 = vmatprep.subr.mxu0 0.0
    %125 = vmatpush1.msra.mxu0 %v92
    %126 = vmatprep.subr.mxu0 0.0
    %127 = vmatpush2.msra.mxu0 0.0
    %128 = vmatprep.subr.mxu0 0.0
    %129 = vmatpush2.msra.mxu0 0.0
    %130 = vmatprep.subr.mxu0 0.0
    %131 = vmatpush2.msra.mxu0 0.0
    %132 = vmatprep.subr.mxu0 0.0
    %133 = vmatpush2.msra.mxu0 0.0
    %134 = vmatprep.subr.mxu0 0.0
    %135 = vmatpush2.msra.mxu0 0.0
    %136 = vmatprep.subr.mxu0 0.0
    %137 = vmatpush2.msra.mxu0 0.0
    %138 = vmatprep.subr.mxu0 0.0
    %139 = vmatpush2.msra.mxu0 0.0
    %140 = vmatprep.subr.mxu0 0.0
    %141 = vmatpush2.msra.mxu0 0.0
    %142 = vmatprep.subr.mxu0 0.0
    %143 = vmatpush2.msra.mxu0 0.0
    %144 = vmatprep.subr.mxu0 0.0
    %145 = vmatpush2.msra.mxu0 0.0
    %146 = vmatprep.subr.mxu0 0.0
    %147 = vmatpush2.msra.mxu0 0.0
    %148 = vmatprep.subr.mxu0 0.0
    %149 = vmatpush2.msra.mxu0 0.0
    %150 = vmatprep.subr.mxu0 0.0
    %151 = vmatpush2.msra.mxu0 0.0
    %152 = vmatprep.subr.mxu0 0.0
    %153 = vmatpush2.msra.mxu0 0.0
    %154 = vmatprep.subr.mxu0 0.0
    %155 = vmatpush2.msra.mxu0 0.0
    %156 = vmatprep.subr.mxu0 0.0
    %157 = vmatpush2.msra.mxu0 0.0
    %158 = vmatprep.mubr.f32.mxu0 0.0
    %159 = vmatmul.mubr.f32.gmra.mxu0 %v85
    %v160 = vpop.f32.mrf.mxu0
    %v161 = vadd.f32 %v82, %v160
    %v162 = vpop.f32.mrf.mxu0
    %163 = vmatprep.mubr.f32.mxu0 0.0
    %164 = vmatmul.mubr.f32.gmra.mxu0 %v88
    %v165 = vpop.f32.mrf.mxu0
    %v166 = vadd.f32 %v82, %v165
    %v167 = vpop.f32.mrf.mxu0
    %168 = vdwg.mxu0
    %v169 = vlaneseq
    %v170 = vshrl.u32 %v169, 7
    %v171 = vsub.s32 2, %v170
    %v172 = vrot.slane %v54, %v171
    %vm173 = vcmask 261120
    %v175 = vsel %vm173, %v76, 0
    %177 = vmatprep.subr.mxu0 0.0
    %178 = vmatpush1.msra.mxu0 0.0
    %179 = vmatprep.subr.mxu0 0.0
    %180 = vmatpush1.msra.mxu0 0.0
    %181 = vmatprep.subr.mxu0 0.0
    %182 = vmatpush1.msra.mxu0 0.0
    %183 = vmatprep.subr.mxu0 0.0
    %184 = vmatpush1.msra.mxu0 0.0
    %185 = vmatprep.subr.mxu0 0.0
    %186 = vmatpush1.msra.mxu0 0.0
    %187 = vmatprep.subr.mxu0 0.0
    %188 = vmatpush1.msra.mxu0 0.0
    %189 = vmatprep.subr.mxu0 0.0
    %190 = vmatpush1.msra.mxu0 0.0
    %191 = vmatprep.subr.mxu0 0.0
    %192 = vmatpush1.msra.mxu0 0.0
    %193 = vmatprep.subr.mxu0 0.0
    %194 = vmatpush1.msra.mxu0 0.0
    %195 = vmatprep.subr.mxu0 0.0
    %196 = vmatpush1.msra.mxu0 0.0
    %197 = vmatprep.subr.mxu0 0.0
    %198 = vmatpush1.msra.mxu0 0.0
    %199 = vmatprep.subr.mxu0 0.0
    %200 = vmatpush1.msra.mxu0 0.0
    %201 = vmatprep.subr.mxu0 0.0
    %202 = vmatpush1.msra.mxu0 %v70
    %203 = vmatprep.subr.mxu0 0.0
    %204 = vmatpush1.msra.mxu0 %v69
    %205 = vmatprep.subr.mxu0 0.0
    %206 = vmatpush1.msra.mxu0 %v68
    %207 = vmatprep.subr.mxu0 0.0
    %208 = vmatpush1.msra.mxu0 %v67
    %209 = vmatprep.subr.mxu0 0.0
    %210 = vmatpush2.msra.mxu0 0.0
    %211 = vmatprep.subr.mxu0 0.0
    %212 = vmatpush2.msra.mxu0 0.0
    %213 = vmatprep.subr.mxu0 0.0
    %214 = vmatpush2.msra.mxu0 0.0
    %215 = vmatprep.subr.mxu0 0.0
    %216 = vmatpush2.msra.mxu0 0.0
    %217 = vmatprep.subr.mxu0 0.0
    %218 = vmatpush2.msra.mxu0 0.0
    %219 = vmatprep.subr.mxu0 0.0
    %220 = vmatpush2.msra.mxu0 0.0
    %221 = vmatprep.subr.mxu0 0.0
    %222 = vmatpush2.msra.mxu0 0.0
    %223 = vmatprep.subr.mxu0 0.0
    %224 = vmatpush2.msra.mxu0 0.0
    %225 = vmatprep.subr.mxu0 0.0
    %226 = vmatpush2.msra.mxu0 0.0
    %227 = vmatprep.subr.mxu0 0.0
    %228 = vmatpush2.msra.mxu0 0.0
    %229 = vmatprep.subr.mxu0 0.0
    %230 = vmatpush2.msra.mxu0 0.0
    %231 = vmatprep.subr.mxu0 0.0
    %232 = vmatpush2.msra.mxu0 0.0
    %233 = vmatprep.subr.mxu0 0.0
    %234 = vmatpush2.msra.mxu0 0.0
    %235 = vmatprep.subr.mxu0 0.0
    %236 = vmatpush2.msra.mxu0 0.0
    %237 = vmatprep.subr.mxu0 0.0
    %238 = vmatpush2.msra.mxu0 0.0
    %239 = vmatprep.subr.mxu0 0.0
    %240 = vmatpush2.msra.mxu0 0.0
    %241 = vmatprep.mubr.f32.mxu0 0.0
    %242 = vmatmul.mubr.f32.gmra.mxu0 %v175
    %v243 = vpop.f32.mrf.mxu0
    %v244 = vadd.f32 %v172, %v243
    %v245 = vpop.f32.mrf.mxu0
    %246 = vdwg.mxu0
    %v247 = vlaneseq
    %v248 = vshrl.u32 %v247, 7
    %v249 = vsub.s32 0, %v248
    %v250 = vrot.slane %v244, %v249
    %v251 = vlaneseq
    %v252 = vshrl.u32 %v251, 7
    %v253 = vsub.s32 1, %v252
    %v254 = vrot.slane %v244, %v253
    %v256 = vsel %vm173, %v161, 0
    %v259 = vsel %vm173, %v166, 0
    %261 = vmatprep.subr.mxu0 0.0
    %262 = vmatpush1.msra.mxu0 0.0
    %263 = vmatprep.subr.mxu0 0.0
    %264 = vmatpush1.msra.mxu0 0.0
    %265 = vmatprep.subr.mxu0 0.0
    %266 = vmatpush1.msra.mxu0 0.0
    %267 = vmatprep.subr.mxu0 0.0
    %268 = vmatpush1.msra.mxu0 0.0
    %269 = vmatprep.subr.mxu0 0.0
    %270 = vmatpush1.msra.mxu0 0.0
    %271 = vmatprep.subr.mxu0 0.0
    %272 = vmatpush1.msra.mxu0 0.0
    %273 = vmatprep.subr.mxu0 0.0
    %274 = vmatpush1.msra.mxu0 0.0
    %275 = vmatprep.subr.mxu0 0.0
    %276 = vmatpush1.msra.mxu0 0.0
    %277 = vmatprep.subr.mxu0 0.0
    %278 = vmatpush1.msra.mxu0 0.0
    %279 = vmatprep.subr.mxu0 0.0
    %280 = vmatpush1.msra.mxu0 0.0
    %281 = vmatprep.subr.mxu0 0.0
    %282 = vmatpush1.msra.mxu0 0.0
    %283 = vmatprep.subr.mxu0 0.0
    %284 = vmatpush1.msra.mxu0 0.0
    %285 = vmatprep.subr.mxu0 0.0
    %286 = vmatpush1.msra.mxu0 %v66
    %287 = vmatprep.subr.mxu0 0.0
    %288 = vmatpush1.msra.mxu0 %v65
    %289 = vmatprep.subr.mxu0 0.0
    %290 = vmatpush1.msra.mxu0 %v64
    %291 = vmatprep.subr.mxu0 0.0
    %292 = vmatpush1.msra.mxu0 %v63
    %293 = vmatprep.subr.mxu0 0.0
    %294 = vmatpush2.msra.mxu0 0.0
    %295 = vmatprep.subr.mxu0 0.0
    %296 = vmatpush2.msra.mxu0 0.0
    %297 = vmatprep.subr.mxu0 0.0
    %298 = vmatpush2.msra.mxu0 0.0
    %299 = vmatprep.subr.mxu0 0.0
    %300 = vmatpush2.msra.mxu0 0.0
    %301 = vmatprep.subr.mxu0 0.0
    %302 = vmatpush2.msra.mxu0 0.0
    %303 = vmatprep.subr.mxu0 0.0
    %304 = vmatpush2.msra.mxu0 0.0
    %305 = vmatprep.subr.mxu0 0.0
    %306 = vmatpush2.msra.mxu0 0.0
    %307 = vmatprep.subr.mxu0 0.0
    %308 = vmatpush2.msra.mxu0 0.0
    %309 = vmatprep.subr.mxu0 0.0
    %310 = vmatpush2.msra.mxu0 0.0
    %311 = vmatprep.subr.mxu0 0.0
    %312 = vmatpush2.msra.mxu0 0.0
    %313 = vmatprep.subr.mxu0 0.0
    %314 = vmatpush2.msra.mxu0 0.0
    %315 = vmatprep.subr.mxu0 0.0
    %316 = vmatpush2.msra.mxu0 0.0
    %317 = vmatprep.subr.mxu0 0.0
    %318 = vmatpush2.msra.mxu0 0.0
    %319 = vmatprep.subr.mxu0 0.0
    %320 = vmatpush2.msra.mxu0 0.0
    %321 = vmatprep.subr.mxu0 0.0
    %322 = vmatpush2.msra.mxu0 0.0
    %323 = vmatprep.subr.mxu0 0.0
    %324 = vmatpush2.msra.mxu0 0.0
    %325 = vmatprep.mubr.f32.mxu0 0.0
    %326 = vmatmul.mubr.f32.gmra.mxu0 %v256
    %v327 = vpop.f32.mrf.mxu0
    %v328 = vadd.f32 %v250, %v327
    %v329 = vpop.f32.mrf.mxu0
    %330 = vmatprep.mubr.f32.mxu0 0.0
    %331 = vmatmul.mubr.f32.gmra.mxu0 %v259
    %v332 = vpop.f32.mrf.mxu0
    %v333 = vadd.f32 %v254, %v332
    %v334 = vpop.f32.mrf.mxu0
    %335 = vdwg.mxu0
    %vm336 = vcmask 130048
    %v337 = vsel %vm336, %v328, -inf
    %338 = vmax.xlane.f32.xlu0 %v337
    %v339 = vpop.xlane.xlu0 %338
    %v340 = vsel %vm336, %v333, -inf
    %341 = vmax.xlane.f32.xlu0 %v340
    %v342 = vpop.xlane.xlu0 %341
    %v343 = vsub.f32 %v328, %v339
    %v344 = vsub.f32 %v333, %v342
    %v345 = vmul.f32 %v343, 1.442695
    %v346 = vpow.pop %v345
    %v347 = vmul.f32 %v344, 1.442695
    %v348 = vpow.pop %v347
    %v349 = vsel %vm336, %v346, 0.0
    %350 = vadd.xlane.f32.xlu0 %v349
    %v351 = vpop.xlane.xlu0 %350
    %v352 = vsel %vm336, %v348, 0.0
    %353 = vadd.xlane.f32.xlu0 %v352
    %v354 = vpop.xlane.xlu0 %353
    %v355 = vrcp.pop %v351
    %v356 = vmul.f32 %v346, %v355
    %v357 = vrcp.pop %v354
    %v358 = vmul.f32 %v348, %v357
    %v359 = vld [vmem:[#allocation2] sm:$0xff]
    %v360 = vld [vmem:[#allocation2 + $0x8] sm:$0xff]
    %v362 = vsel %vm336, %v356, 0
    %364 = vmatprep.subr.mxu0 0.0
    %365 = vmatpush1.msra.mxu0 0.0
    %366 = vmatprep.subr.mxu0 0.0
    %367 = vmatpush1.msra.mxu0 0.0
    %368 = vmatprep.subr.mxu0 0.0
    %369 = vmatpush1.msra.mxu0 0.0
    %370 = vmatprep.subr.mxu0 0.0
    %371 = vmatpush1.msra.mxu0 0.0
    %372 = vmatprep.subr.mxu0 0.0
    %373 = vmatpush1.msra.mxu0 0.0
    %374 = vmatprep.subr.mxu0 0.0
    %375 = vmatpush1.msra.mxu0 0.0
    %376 = vmatprep.subr.mxu0 0.0
    %377 = vmatpush1.msra.mxu0 0.0
    %378 = vmatprep.subr.mxu0 0.0
    %379 = vmatpush1.msra.mxu0 0.0
    %380 = vmatprep.subr.mxu0 0.0
    %381 = vmatpush1.msra.mxu0 0.0
    %382 = vmatprep.subr.mxu0 0.0
    %383 = vmatpush1.msra.mxu0 0.0
    %384 = vmatprep.subr.mxu0 0.0
    %385 = vmatpush1.msra.mxu0 0.0
    %386 = vmatprep.subr.mxu0 0.0
    %387 = vmatpush1.msra.mxu0 0.0
    %388 = vmatprep.subr.mxu0 0.0
    %389 = vmatpush1.msra.mxu0 0.0
    %390 = vmatprep.subr.mxu0 0.0
    %391 = vmatpush1.msra.mxu0 0.0
    %392 = vmatprep.subr.mxu0 0.0
    %393 = vmatpush1.msra.mxu0 %v360
    %394 = vmatprep.subr.mxu0 0.0
    %395 = vmatpush1.msra.mxu0 %v359
    %396 = vmatprep.subr.mxu0 0.0
    %397 = vmatpush2.msra.mxu0 0.0
    %398 = vmatprep.subr.mxu0 0.0
    %399 = vmatpush2.msra.mxu0 0.0
    %400 = vmatprep.subr.mxu0 0.0
    %401 = vmatpush2.msra.mxu0 0.0
    %402 = vmatprep.subr.mxu0 0.0
    %403 = vmatpush2.msra.mxu0 0.0
    %404 = vmatprep.subr.mxu0 0.0
    %405 = vmatpush2.msra.mxu0 0.0
    %406 = vmatprep.subr.mxu0 0.0
    %407 = vmatpush2.msra.mxu0 0.0
    %408 = vmatprep.subr.mxu0 0.0
    %409 = vmatpush2.msra.mxu0 0.0
    %410 = vmatprep.subr.mxu0 0.0
    %411 = vmatpush2.msra.mxu0 0.0
    %412 = vmatprep.subr.mxu0 0.0
    %413 = vmatpush2.msra.mxu0 0.0
    %414 = vmatprep.subr.mxu0 0.0
    %415 = vmatpush2.msra.mxu0 0.0
    %416 = vmatprep.subr.mxu0 0.0
    %417 = vmatpush2.msra.mxu0 0.0
    %418 = vmatprep.subr.mxu0 0.0
    %419 = vmatpush2.msra.mxu0 0.0
    %420 = vmatprep.subr.mxu0 0.0
    %421 = vmatpush2.msra.mxu0 0.0
    %422 = vmatprep.subr.mxu0 0.0
    %423 = vmatpush2.msra.mxu0 0.0
    %424 = vmatprep.subr.mxu0 0.0
    %425 = vmatpush2.msra.mxu0 0.0
    %426 = vmatprep.subr.mxu0 0.0
    %427 = vmatpush2.msra.mxu0 0.0
    %428 = vmatprep.mubr.f32.mxu0 0.0
    %429 = vmatmul.mubr.f32.gmra.mxu0 %v362
    %v430 = vpop.f32.mrf.mxu0
    %v431 = vadd.f32 0.0, %v430
    %v432 = vpop.f32.mrf.mxu0
    %433 = vdwg.mxu0
    %s434 = scalar_lea.vmem [#allocation2], 16
    %v435 = vld [vmem:[%s434] sm:$0xff]
    %v436 = vld [vmem:[%s434 + $0x8] sm:$0xff]
    %v438 = vsel %vm336, %v358, 0
    %440 = vmatprep.subr.mxu0 0.0
    %441 = vmatpush1.msra.mxu0 0.0
    %442 = vmatprep.subr.mxu0 0.0
    %443 = vmatpush1.msra.mxu0 0.0
    %444 = vmatprep.subr.mxu0 0.0
    %445 = vmatpush1.msra.mxu0 0.0
    %446 = vmatprep.subr.mxu0 0.0
    %447 = vmatpush1.msra.mxu0 0.0
    %448 = vmatprep.subr.mxu0 0.0
    %449 = vmatpush1.msra.mxu0 0.0
    %450 = vmatprep.subr.mxu0 0.0
    %451 = vmatpush1.msra.mxu0 0.0
    %452 = vmatprep.subr.mxu0 0.0
    %453 = vmatpush1.msra.mxu0 0.0
    %454 = vmatprep.subr.mxu0 0.0
    %455 = vmatpush1.msra.mxu0 0.0
    %456 = vmatprep.subr.mxu0 0.0
    %457 = vmatpush1.msra.mxu0 0.0
    %458 = vmatprep.subr.mxu0 0.0
    %459 = vmatpush1.msra.mxu0 0.0
    %460 = vmatprep.subr.mxu0 0.0
    %461 = vmatpush1.msra.mxu0 0.0
    %462 = vmatprep.subr.mxu0 0.0
    %463 = vmatpush1.msra.mxu0 0.0
    %464 = vmatprep.subr.mxu0 0.0
    %465 = vmatpush1.msra.mxu0 0.0
    %466 = vmatprep.subr.mxu0 0.0
    %467 = vmatpush1.msra.mxu0 0.0
    %468 = vmatprep.subr.mxu0 0.0
    %469 = vmatpush1.msra.mxu0 %v436
    %470 = vmatprep.subr.mxu0 0.0
    %471 = vmatpush1.msra.mxu0 %v435
    %472 = vmatprep.subr.mxu0 0.0
    %473 = vmatpush2.msra.mxu0 0.0
    %474 = vmatprep.subr.mxu0 0.0
    %475 = vmatpush2.msra.mxu0 0.0
    %476 = vmatprep.subr.mxu0 0.0
    %477 = vmatpush2.msra.mxu0 0.0
    %478 = vmatprep.subr.mxu0 0.0
    %479 = vmatpush2.msra.mxu0 0.0
    %480 = vmatprep.subr.mxu0 0.0
    %481 = vmatpush2.msra.mxu0 0.0
    %482 = vmatprep.subr.mxu0 0.0
    %483 = vmatpush2.msra.mxu0 0.0
    %484 = vmatprep.subr.mxu0 0.0
    %485 = vmatpush2.msra.mxu0 0.0
    %486 = vmatprep.subr.mxu0 0.0
    %487 = vmatpush2.msra.mxu0 0.0
    %488 = vmatprep.subr.mxu0 0.0
    %489 = vmatpush2.msra.mxu0 0.0
    %490 = vmatprep.subr.mxu0 0.0
    %491 = vmatpush2.msra.mxu0 0.0
    %492 = vmatprep.subr.mxu0 0.0
    %493 = vmatpush2.msra.mxu0 0.0
    %494 = vmatprep.subr.mxu0 0.0
    %495 = vmatpush2.msra.mxu0 0.0
    %496 = vmatprep.subr.mxu0 0.0
    %497 = vmatpush2.msra.mxu0 0.0
    %498 = vmatprep.subr.mxu0 0.0
    %499 = vmatpush2.msra.mxu0 0.0
    %500 = vmatprep.subr.mxu0 0.0
    %501 = vmatpush2.msra.mxu0 0.0
    %502 = vmatprep.subr.mxu0 0.0
    %503 = vmatpush2.msra.mxu0 0.0
    %504 = vmatprep.mubr.f32.mxu0 0.0
    %505 = vmatmul.mubr.f32.gmra.mxu0 %v438
    %v506 = vpop.f32.mrf.mxu0
    %v507 = vadd.f32 0.0, %v506
    %v508 = vpop.f32.mrf.mxu0
    %509 = vdwg.mxu0
    %v511 = vsel %vm173, %v431, 0
    %v514 = vsel %vm173, %v507, 0
    %516 = vmatprep.subr.mxu0 0.0
    %517 = vmatpush1.msra.mxu0 0.0
    %518 = vmatprep.subr.mxu0 0.0
    %519 = vmatpush1.msra.mxu0 0.0
    %520 = vmatprep.subr.mxu0 0.0
    %521 = vmatpush1.msra.mxu0 0.0
    %522 = vmatprep.subr.mxu0 0.0
    %523 = vmatpush1.msra.mxu0 0.0
    %524 = vmatprep.subr.mxu0 0.0
    %525 = vmatpush1.msra.mxu0 0.0
    %526 = vmatprep.subr.mxu0 0.0
    %527 = vmatpush1.msra.mxu0 0.0
    %528 = vmatprep.subr.mxu0 0.0
    %529 = vmatpush1.msra.mxu0 0.0
    %530 = vmatprep.subr.mxu0 0.0
    %531 = vmatpush1.msra.mxu0 0.0
    %532 = vmatprep.subr.mxu0 0.0
    %533 = vmatpush1.msra.mxu0 0.0
    %534 = vmatprep.subr.mxu0 0.0
    %535 = vmatpush1.msra.mxu0 0.0
    %536 = vmatprep.subr.mxu0 0.0
    %537 = vmatpush1.msra.mxu0 0.0
    %538 = vmatprep.subr.mxu0 0.0
    %539 = vmatpush1.msra.mxu0 0.0
    %540 = vmatprep.subr.mxu0 0.0
    %541 = vmatpush1.msra.mxu0 %v62
    %542 = vmatprep.subr.mxu0 0.0
    %543 = vmatpush1.msra.mxu0 %v61
    %544 = vmatprep.subr.mxu0 0.0
    %545 = vmatpush1.msra.mxu0 %v60
    %546 = vmatprep.subr.mxu0 0.0
    %547 = vmatpush1.msra.mxu0 %v59
    %548 = vmatprep.subr.mxu0 0.0
    %549 = vmatpush2.msra.mxu0 0.0
    %550 = vmatprep.subr.mxu0 0.0
    %551 = vmatpush2.msra.mxu0 0.0
    %552 = vmatprep.subr.mxu0 0.0
    %553 = vmatpush2.msra.mxu0 0.0
    %554 = vmatprep.subr.mxu0 0.0
    %555 = vmatpush2.msra.mxu0 0.0
    %556 = vmatprep.subr.mxu0 0.0
    %557 = vmatpush2.msra.mxu0 0.0
    %558 = vmatprep.subr.mxu0 0.0
    %559 = vmatpush2.msra.mxu0 0.0
    %560 = vmatprep.subr.mxu0 0.0
    %561 = vmatpush2.msra.mxu0 0.0
    %562 = vmatprep.subr.mxu0 0.0
    %563 = vmatpush2.msra.mxu0 0.0
    %564 = vmatprep.subr.mxu0 0.0
    %565 = vmatpush2.msra.mxu0 0.0
    %566 = vmatprep.subr.mxu0 0.0
    %567 = vmatpush2.msra.mxu0 0.0
    %568 = vmatprep.subr.mxu0 0.0
    %569 = vmatpush2.msra.mxu0 0.0
    %570 = vmatprep.subr.mxu0 0.0
    %571 = vmatpush2.msra.mxu0 0.0
    %572 = vmatprep.subr.mxu0 0.0
    %573 = vmatpush2.msra.mxu0 0.0
    %574 = vmatprep.subr.mxu0 0.0
    %575 = vmatpush2.msra.mxu0 0.0
    %576 = vmatprep.subr.mxu0 0.0
    %577 = vmatpush2.msra.mxu0 0.0
    %578 = vmatprep.subr.mxu0 0.0
    %579 = vmatpush2.msra.mxu0 0.0
    %580 = vmatprep.mubr.f32.mxu0 0.0
    %581 = vmatmul.mubr.f32.gmra.mxu0 %v511
    %v582 = vpop.f32.mrf.mxu0
    %v583 = vadd.f32 0.0, %v582
    %v584 = vpop.f32.mrf.mxu0
    %585 = vmatprep.mubr.f32.mxu0 0.0
    %586 = vmatmul.mubr.f32.gmra.mxu0 %v514
    %v587 = vpop.f32.mrf.mxu0
    %v588 = vadd.f32 0.0, %v587
    %v589 = vpop.f32.mrf.mxu0
    %590 = vdwg.mxu0
    %591 = vmatprep.subr.mxu0 0.0
    %592 = vmatpush1.msra.mxu0 0.0
    %593 = vmatprep.subr.mxu0 0.0
    %594 = vmatpush1.msra.mxu0 0.0
    %595 = vmatprep.subr.mxu0 0.0
    %596 = vmatpush1.msra.mxu0 0.0
    %597 = vmatprep.subr.mxu0 0.0
    %598 = vmatpush1.msra.mxu0 0.0
    %599 = vmatprep.subr.mxu0 0.0
    %600 = vmatpush1.msra.mxu0 0.0
    %601 = vmatprep.subr.mxu0 0.0
    %602 = vmatpush1.msra.mxu0 0.0
    %603 = vmatprep.subr.mxu0 0.0
    %604 = vmatpush1.msra.mxu0 0.0
    %605 = vmatprep.subr.mxu0 0.0
    %606 = vmatpush1.msra.mxu0 0.0
    %607 = vmatprep.subr.mxu0 0.0
    %608 = vmatpush1.msra.mxu0 0.0
    %609 = vmatprep.subr.mxu0 0.0
    %610 = vmatpush1.msra.mxu0 0.0
    %611 = vmatprep.subr.mxu0 0.0
    %612 = vmatpush1.msra.mxu0 0.0
    %613 = vmatprep.subr.mxu0 0.0
    %614 = vmatpush1.msra.mxu0 0.0
    %615 = vmatprep.subr.mxu0 0.0
    %616 = vmatpush1.msra.mxu0 %v58
    %617 = vmatprep.subr.mxu0 0.0
    %618 = vmatpush1.msra.mxu0 %v57
    %619 = vmatprep.subr.mxu0 0.0
    %620 = vmatpush1.msra.mxu0 %v56
    %621 = vmatprep.subr.mxu0 0.0
    %622 = vmatpush1.msra.mxu0 %v55
    %623 = vmatprep.subr.mxu0 0.0
    %624 = vmatpush2.msra.mxu0 0.0
    %625 = vmatprep.subr.mxu0 0.0
    %626 = vmatpush2.msra.mxu0 0.0
    %627 = vmatprep.subr.mxu0 0.0
    %628 = vmatpush2.msra.mxu0 0.0
    %629 = vmatprep.subr.mxu0 0.0
    %630 = vmatpush2.msra.mxu0 0.0
    %631 = vmatprep.subr.mxu0 0.0
    %632 = vmatpush2.msra.mxu0 0.0
    %633 = vmatprep.subr.mxu0 0.0
    %634 = vmatpush2.msra.mxu0 0.0
    %635 = vmatprep.subr.mxu0 0.0
    %636 = vmatpush2.msra.mxu0 0.0
    %637 = vmatprep.subr.mxu0 0.0
    %638 = vmatpush2.msra.mxu0 0.0
    %639 = vmatprep.subr.mxu0 0.0
    %640 = vmatpush2.msra.mxu0 0.0
    %641 = vmatprep.subr.mxu0 0.0
    %642 = vmatpush2.msra.mxu0 0.0
    %643 = vmatprep.subr.mxu0 0.0
    %644 = vmatpush2.msra.mxu0 0.0
    %645 = vmatprep.subr.mxu0 0.0
    %646 = vmatpush2.msra.mxu0 0.0
    %647 = vmatprep.subr.mxu0 0.0
    %648 = vmatpush2.msra.mxu0 0.0
    %649 = vmatprep.subr.mxu0 0.0
    %650 = vmatpush2.msra.mxu0 0.0
    %651 = vmatprep.subr.mxu0 0.0
    %652 = vmatpush2.msra.mxu0 0.0
    %653 = vmatprep.subr.mxu0 0.0
    %654 = vmatpush2.msra.mxu0 0.0
    %655 = vmatprep.mubr.f32.mxu0 0.0
    %656 = vmatmul.mubr.f32.gmra.mxu0 %v256
    %v657 = vpop.f32.mrf.mxu0
    %v658 = vadd.f32 %v583, %v657
    %v659 = vpop.f32.mrf.mxu0
    %660 = vmatprep.mubr.f32.mxu0 0.0
    %661 = vmatmul.mubr.f32.gmra.mxu0 %v259
    %v662 = vpop.f32.mrf.mxu0
    %v663 = vadd.f32 %v588, %v662
    %v664 = vpop.f32.mrf.mxu0
    %665 = vdwg.mxu0
    %v666 = vlaneseq
    %v667 = vshrl.u32 %v666, 7
    %v668 = vsub.s32 3, %v667
    %v669 = vrot.slane %v54, %v668
    %v670 = vadd.f32 %v658, %v669
    %v671 = vadd.f32 %v663, %v669
    %v672 = vmax.f32 %v670, 0.0
    %v673 = vmax.f32 %v671, 0.0
    %v674 = vlaneseq
    %v675 = vshrl.u32 %v674, 7
    %v676 = vsub.s32 0, %v675
    %v677 = vrot.slane %v54, %v676
    %v679 = vsel %vm173, %v672, 0
    %v682 = vsel %vm173, %v673, 0
    %684 = vmatprep.subr.mxu0 0.0
    %685 = vmatpush1.msra.mxu0 0.0
    %686 = vmatprep.subr.mxu0 0.0
    %687 = vmatpush1.msra.mxu0 0.0
    %688 = vmatprep.subr.mxu0 0.0
    %689 = vmatpush1.msra.mxu0 0.0
    %690 = vmatprep.subr.mxu0 0.0
    %691 = vmatpush1.msra.mxu0 0.0
    %692 = vmatprep.subr.mxu0 0.0
    %693 = vmatpush1.msra.mxu0 0.0
    %694 = vmatprep.subr.mxu0 0.0
    %695 = vmatpush1.msra.mxu0 0.0
    %696 = vmatprep.subr.mxu0 0.0
    %697 = vmatpush1.msra.mxu0 0.0
    %698 = vmatprep.subr.mxu0 0.0
    %699 = vmatpush1.msra.mxu0 0.0
    %700 = vmatprep.subr.mxu0 0.0
    %701 = vmatpush1.msra.mxu0 0.0
    %702 = vmatprep.subr.mxu0 0.0
    %703 = vmatpush1.msra.mxu0 0.0
    %704 = vmatprep.subr.mxu0 0.0
    %705 = vmatpush1.msra.mxu0 0.0
    %706 = vmatprep.subr.mxu0 0.0
    %707 = vmatpush1.msra.mxu0 0.0
    %708 = vmatprep.subr.mxu0 0.0
    %709 = vmatpush1.msra.mxu0 %v49
    %710 = vmatprep.subr.mxu0 0.0
    %711 = vmatpush1.msra.mxu0 %v48
    %712 = vmatprep.subr.mxu0 0.0
    %713 = vmatpush1.msra.mxu0 %v47
    %714 = vmatprep.subr.mxu0 0.0
    %715 = vmatpush1.msra.mxu0 %v46
    %716 = vmatprep.subr.mxu0 0.0
    %717 = vmatpush2.msra.mxu0 0.0
    %718 = vmatprep.subr.mxu0 0.0
    %719 = vmatpush2.msra.mxu0 0.0
    %720 = vmatprep.subr.mxu0 0.0
    %721 = vmatpush2.msra.mxu0 0.0
    %722 = vmatprep.subr.mxu0 0.0
    %723 = vmatpush2.msra.mxu0 0.0
    %724 = vmatprep.subr.mxu0 0.0
    %725 = vmatpush2.msra.mxu0 0.0
    %726 = vmatprep.subr.mxu0 0.0
    %727 = vmatpush2.msra.mxu0 0.0
    %728 = vmatprep.subr.mxu0 0.0
    %729 = vmatpush2.msra.mxu0 0.0
    %730 = vmatprep.subr.mxu0 0.0
    %731 = vmatpush2.msra.mxu0 0.0
    %732 = vmatprep.subr.mxu0 0.0
    %733 = vmatpush2.msra.mxu0 0.0
    %734 = vmatprep.subr.mxu0 0.0
    %735 = vmatpush2.msra.mxu0 0.0
    %736 = vmatprep.subr.mxu0 0.0
    %737 = vmatpush2.msra.mxu0 0.0
    %738 = vmatprep.subr.mxu0 0.0
    %739 = vmatpush2.msra.mxu0 0.0
    %740 = vmatprep.subr.mxu0 0.0
    %741 = vmatpush2.msra.mxu0 0.0
    %742 = vmatprep.subr.mxu0 0.0
    %743 = vmatpush2.msra.mxu0 0.0
    %744 = vmatprep.subr.mxu0 0.0
    %745 = vmatpush2.msra.mxu0 0.0
    %746 = vmatprep.subr.mxu0 0.0
    %747 = vmatpush2.msra.mxu0 0.0
    %748 = vmatprep.mubr.f32.mxu0 0.0
    %749 = vmatmul.mubr.f32.gmra.mxu0 %v679
    %v750 = vpop.f32.mrf.mxu0
    %v751 = vadd.f32 %v677, %v750
    %v752 = vpop.f32.mrf.mxu0
    %753 = vmatprep.mubr.f32.mxu0 0.0
    %754 = vmatmul.mubr.f32.gmra.mxu0 %v682
    %v755 = vpop.f32.mrf.mxu0
    %v756 = vadd.f32 %v677, %v755
    %v757 = vpop.f32.mrf.mxu0
    %758 = vdwg.mxu0
    %v760 = vrot.slane %v756, 7
    %vm762 = vcmask 1040384
    %v763 = vsel %vm762, %v751, %v760
    %v765 = vrot.slane %v751, 1
    %v767 = vsel %vm762, %v765, %v756
    %v768 = vrot.slane %v751, 2
    %v770 = vrot.slane %v756, 1
    %v772 = vsel %vm762, %v768, %v770
    %v773 = vrot.slane %v751, 3
    %v775 = vrot.slane %v756, 2
    %v777 = vsel %vm762, %v773, %v775
    %v778 = vrot.slane %v751, 4
    %v780 = vrot.slane %v756, 3
    %v782 = vsel %vm762, %v778, %v780
    %v783 = vrot.slane %v751, 5
    %v785 = vrot.slane %v756, 4
    %v787 = vsel %vm762, %v783, %v785
    %v788 = vrot.slane %v751, 6
    %v790 = vrot.slane %v756, 5
    %v792 = vsel %vm762, %v788, %v790
    %v793 = vrot.slane %v751, 7
    %v795 = vrot.slane %v756, 6
    %v797 = vsel %vm762, %v793, %v795
    %798 = vmatprep.subr.mxu0 0.0
    %799 = vmatpush1.msra.mxu0 0.0
    %800 = vmatprep.subr.mxu0 0.0
    %801 = vmatpush1.msra.mxu0 0.0
    %802 = vmatprep.subr.mxu0 0.0
    %803 = vmatpush1.msra.mxu0 0.0
    %804 = vmatprep.subr.mxu0 0.0
    %805 = vmatpush1.msra.mxu0 0.0
    %806 = vmatprep.subr.mxu0 0.0
    %807 = vmatpush1.msra.mxu0 0.0
    %808 = vmatprep.subr.mxu0 0.0
    %809 = vmatpush1.msra.mxu0 0.0
    %810 = vmatprep.subr.mxu0 0.0
    %811 = vmatpush1.msra.mxu0 0.0
    %812 = vmatprep.subr.mxu0 0.0
    %813 = vmatpush1.msra.mxu0 0.0
    %814 = vmatprep.subr.mxu0 0.0
    %815 = vmatpush1.msra.mxu0 0.0
    %816 = vmatprep.subr.mxu0 0.0
    %817 = vmatpush1.msra.mxu0 0.0
    %818 = vmatprep.subr.mxu0 0.0
    %819 = vmatpush1.msra.mxu0 0.0
    %820 = vmatprep.subr.mxu0 0.0
    %821 = vmatpush1.msra.mxu0 0.0
    %822 = vmatprep.subr.mxu0 0.0
    %823 = vmatpush1.msra.mxu0 %v53
    %824 = vmatprep.subr.mxu0 0.0
    %825 = vmatpush1.msra.mxu0 %v52
    %826 = vmatprep.subr.mxu0 0.0
    %827 = vmatpush1.msra.mxu0 %v51
    %828 = vmatprep.subr.mxu0 0.0
    %829 = vmatpush1.msra.mxu0 %v50
    %830 = vmatprep.subr.mxu0 0.0
    %831 = vmatpush2.msra.mxu0 0.0
    %832 = vmatprep.subr.mxu0 0.0
    %833 = vmatpush2.msra.mxu0 0.0
    %834 = vmatprep.subr.mxu0 0.0
    %835 = vmatpush2.msra.mxu0 0.0
    %836 = vmatprep.subr.mxu0 0.0
    %837 = vmatpush2.msra.mxu0 0.0
    %838 = vmatprep.subr.mxu0 0.0
    %839 = vmatpush2.msra.mxu0 0.0
    %840 = vmatprep.subr.mxu0 0.0
    %841 = vmatpush2.msra.mxu0 0.0
    %842 = vmatprep.subr.mxu0 0.0
    %843 = vmatpush2.msra.mxu0 0.0
    %844 = vmatprep.subr.mxu0 0.0
    %845 = vmatpush2.msra.mxu0 0.0
    %846 = vmatprep.subr.mxu0 0.0
    %847 = vmatpush2.msra.mxu0 0.0
    %848 = vmatprep.subr.mxu0 0.0
    %849 = vmatpush2.msra.mxu0 0.0
    %850 = vmatprep.subr.mxu0 0.0
    %851 = vmatpush2.msra.mxu0 0.0
    %852 = vmatprep.subr.mxu0 0.0
    %853 = vmatpush2.msra.mxu0 0.0
    %854 = vmatprep.subr.mxu0 0.0
    %855 = vmatpush2.msra.mxu0 0.0
    %856 = vmatprep.subr.mxu0 0.0
    %857 = vmatpush2.msra.mxu0 0.0
    %858 = vmatprep.subr.mxu0 0.0
    %859 = vmatpush2.msra.mxu0 0.0
    %860 = vmatprep.subr.mxu0 0.0
    %861 = vmatpush2.msra.mxu0 0.0
    %862 = vmatprep.mubr.f32.mxu0 0.0
    %863 = vmatmul.mubr.f32.gmra.mxu0 %v175
    %v864 = vpop.f32.mrf.mxu0
    %v865 = vadd.f32 0.0, %v864
    %v866 = vpop.f32.mrf.mxu0
    %867 = vdwg.mxu0
    %v868 = vadd.f32 %v763, %v865
    %v869 = vxor.u32 %v868, 2147483648
    %v870 = vmul.f32 %v869, 1.442695
    %v871 = vpow.pop %v870
    %v872 = vadd.f32 %v871, 1.0
    %v873 = vrcp.pop %v872
    %v874 = vmul.f32 1.0, %v873
    %v875 = vtanh.pop %v868
    %v876 = vmul.f32 %v874, 0.0
    %878 = vrot.lane.b32.xlu0 %v875, 64
    %v879 = vpop.permute.xlu0 %878
    %v881 = vmul.f32 %v874, %v879
    %883 = vrot.lane.b32.xlu0 %v881, 32
    %v884 = vpop.permute.xlu0 %883
    %v886 = vadd.f32 %v876, %v884
    %v887 = vtanh.pop %v886
    %889 = vrot.lane.b32.xlu0 %v887, 64
    %v890 = vpop.permute.xlu0 %889
    %v892 = vmul.f32 %v874, %v890
    %894 = vrot.lane.b32.xlu0 %v892, 32
    %v895 = vpop.permute.xlu0 %894
    %v896 = vsel %vm173, %v895, 0
    %898 = vmatprep.subr.mxu0 0.0
    %899 = vmatpush1.msra.mxu0 0.0
    %900 = vmatprep.subr.mxu0 0.0
    %901 = vmatpush1.msra.mxu0 0.0
    %902 = vmatprep.subr.mxu0 0.0
    %903 = vmatpush1.msra.mxu0 0.0
    %904 = vmatprep.subr.mxu0 0.0
    %905 = vmatpush1.msra.mxu0 0.0
    %906 = vmatprep.subr.mxu0 0.0
    %907 = vmatpush1.msra.mxu0 0.0
    %908 = vmatprep.subr.mxu0 0.0
    %909 = vmatpush1.msra.mxu0 0.0
    %910 = vmatprep.subr.mxu0 0.0
    %911 = vmatpush1.msra.mxu0 0.0
    %912 = vmatprep.subr.mxu0 0.0
    %913 = vmatpush1.msra.mxu0 0.0
    %914 = vmatprep.subr.mxu0 0.0
    %915 = vmatpush1.msra.mxu0 0.0
    %916 = vmatprep.subr.mxu0 0.0
    %917 = vmatpush1.msra.mxu0 0.0
    %918 = vmatprep.subr.mxu0 0.0
    %919 = vmatpush1.msra.mxu0 0.0
    %920 = vmatprep.subr.mxu0 0.0
    %921 = vmatpush1.msra.mxu0 0.0
    %922 = vmatprep.subr.mxu0 0.0
    %923 = vmatpush1.msra.mxu0 %v53
    %924 = vmatprep.subr.mxu0 0.0
    %925 = vmatpush1.msra.mxu0 %v52
    %926 = vmatprep.subr.mxu0 0.0
    %927 = vmatpush1.msra.mxu0 %v51
    %928 = vmatprep.subr.mxu0 0.0
    %929 = vmatpush1.msra.mxu0 %v50
    %930 = vmatprep.subr.mxu0 0.0
    %931 = vmatpush2.msra.mxu0 0.0
    %932 = vmatprep.subr.mxu0 0.0
    %933 = vmatpush2.msra.mxu0 0.0
    %934 = vmatprep.subr.mxu0 0.0
    %935 = vmatpush2.msra.mxu0 0.0
    %936 = vmatprep.subr.mxu0 0.0
    %937 = vmatpush2.msra.mxu0 0.0
    %938 = vmatprep.subr.mxu0 0.0
    %939 = vmatpush2.msra.mxu0 0.0
    %940 = vmatprep.subr.mxu0 0.0
    %941 = vmatpush2.msra.mxu0 0.0
    %942 = vmatprep.subr.mxu0 0.0
    %943 = vmatpush2.msra.mxu0 0.0
    %944 = vmatprep.subr.mxu0 0.0
    %945 = vmatpush2.msra.mxu0 0.0
    %946 = vmatprep.subr.mxu0 0.0
    %947 = vmatpush2.msra.mxu0 0.0
    %948 = vmatprep.subr.mxu0 0.0
    %949 = vmatpush2.msra.mxu0 0.0
    %950 = vmatprep.subr.mxu0 0.0
    %951 = vmatpush2.msra.mxu0 0.0
    %952 = vmatprep.subr.mxu0 0.0
    %953 = vmatpush2.msra.mxu0 0.0
    %954 = vmatprep.subr.mxu0 0.0
    %955 = vmatpush2.msra.mxu0 0.0
    %956 = vmatprep.subr.mxu0 0.0
    %957 = vmatpush2.msra.mxu0 0.0
    %958 = vmatprep.subr.mxu0 0.0
    %959 = vmatpush2.msra.mxu0 0.0
    %960 = vmatprep.subr.mxu0 0.0
    %961 = vmatpush2.msra.mxu0 0.0
    %962 = vmatprep.mubr.f32.mxu0 0.0
    %963 = vmatmul.mubr.f32.gmra.mxu0 %v896
    %v964 = vpop.f32.mrf.mxu0
    %v965 = vadd.f32 0.0, %v964
    %v966 = vpop.f32.mrf.mxu0
    %967 = vdwg.mxu0
    %v968 = vadd.f32 %v767, %v965
    %v969 = vxor.u32 %v968, 2147483648
    %v970 = vmul.f32 %v969, 1.442695
    %v971 = vpow.pop %v970
    %v972 = vadd.f32 %v971, 1.0
    %v973 = vrcp.pop %v972
    %v974 = vmul.f32 1.0, %v973
    %v975 = vtanh.pop %v968
    %v976 = vmul.f32 %v974, %v886
    %978 = vrot.lane.b32.xlu0 %v975, 64
    %v979 = vpop.permute.xlu0 %978
    %v981 = vmul.f32 %v974, %v979
    %983 = vrot.lane.b32.xlu0 %v981, 32
    %v984 = vpop.permute.xlu0 %983
    %v986 = vadd.f32 %v976, %v984
    %v987 = vtanh.pop %v986
    %989 = vrot.lane.b32.xlu0 %v987, 64
    %v990 = vpop.permute.xlu0 %989
    %v992 = vmul.f32 %v974, %v990
    %994 = vrot.lane.b32.xlu0 %v992, 32
    %v995 = vpop.permute.xlu0 %994
    %v996 = vsel %vm173, %v995, 0
    %998 = vmatprep.subr.mxu0 0.0
    %999 = vmatpush1.msra.mxu0 0.0
    %1000 = vmatprep.subr.mxu0 0.0
    %1001 = vmatpush1.msra.mxu0 0.0
    %1002 = vmatprep.subr.mxu0 0.0
    %1003 = vmatpush1.msra.mxu0 0.0
    %1004 = vmatprep.subr.mxu0 0.0
    %1005 = vmatpush1.msra.mxu0 0.0
    %1006 = vmatprep.subr.mxu0 0.0
    %1007 = vmatpush1.msra.mxu0 0.0
    %1008 = vmatprep.subr.mxu0 0.0
    %1009 = vmatpush1.msra.mxu0 0.0
    %1010 = vmatprep.subr.mxu0 0.0
    %1011 = vmatpush1.msra.mxu0 0.0
    %1012 = vmatprep.subr.mxu0 0.0
    %1013 = vmatpush1.msra.mxu0 0.0
    %1014 = vmatprep.subr.mxu0 0.0
    %1015 = vmatpush1.msra.mxu0 0.0
    %1016 = vmatprep.subr.mxu0 0.0
    %1017 = vmatpush1.msra.mxu0 0.0
    %1018 = vmatprep.subr.mxu0 0.0
    %1019 = vmatpush1.msra.mxu0 0.0
    %1020 = vmatprep.subr.mxu0 0.0
    %1021 = vmatpush1.msra.mxu0 0.0
    %1022 = vmatprep.subr.mxu0 0.0
    %1023 = vmatpush1.msra.mxu0 %v53
    %1024 = vmatprep.subr.mxu0 0.0
    %1025 = vmatpush1.msra.mxu0 %v52
    %1026 = vmatprep.subr.mxu0 0.0
    %1027 = vmatpush1.msra.mxu0 %v51
    %1028 = vmatprep.subr.mxu0 0.0
    %1029 = vmatpush1.msra.mxu0 %v50
    %1030 = vmatprep.subr.mxu0 0.0
    %1031 = vmatpush2.msra.mxu0 0.0
    %1032 = vmatprep.subr.mxu0 0.0
    %1033 = vmatpush2.msra.mxu0 0.0
    %1034 = vmatprep.subr.mxu0 0.0
    %1035 = vmatpush2.msra.mxu0 0.0
    %1036 = vmatprep.subr.mxu0 0.0
    %1037 = vmatpush2.msra.mxu0 0.0
    %1038 = vmatprep.subr.mxu0 0.0
    %1039 = vmatpush2.msra.mxu0 0.0
    %1040 = vmatprep.subr.mxu0 0.0
    %1041 = vmatpush2.msra.mxu0 0.0
    %1042 = vmatprep.subr.mxu0 0.0
    %1043 = vmatpush2.msra.mxu0 0.0
    %1044 = vmatprep.subr.mxu0 0.0
    %1045 = vmatpush2.msra.mxu0 0.0
    %1046 = vmatprep.subr.mxu0 0.0
    %1047 = vmatpush2.msra.mxu0 0.0
    %1048 = vmatprep.subr.mxu0 0.0
    %1049 = vmatpush2.msra.mxu0 0.0
    %1050 = vmatprep.subr.mxu0 0.0
    %1051 = vmatpush2.msra.mxu0 0.0
    %1052 = vmatprep.subr.mxu0 0.0
    %1053 = vmatpush2.msra.mxu0 0.0
    %1054 = vmatprep.subr.mxu0 0.0
    %1055 = vmatpush2.msra.mxu0 0.0
    %1056 = vmatprep.subr.mxu0 0.0
    %1057 = vmatpush2.msra.mxu0 0.0
    %1058 = vmatprep.subr.mxu0 0.0
    %1059 = vmatpush2.msra.mxu0 0.0
    %1060 = vmatprep.subr.mxu0 0.0
    %1061 = vmatpush2.msra.mxu0 0.0
    %1062 = vmatprep.mubr.f32.mxu0 0.0
    %1063 = vmatmul.mubr.f32.gmra.mxu0 %v996
    %v1064 = vpop.f32.mrf.mxu0
    %v1065 = vadd.f32 0.0, %v1064
    %v1066 = vpop.f32.mrf.mxu0
    %1067 = vdwg.mxu0
    %v1068 = vadd.f32 %v772, %v1065
    %v1069 = vxor.u32 %v1068, 2147483648
    %v1070 = vmul.f32 %v1069, 1.442695
    %v1071 = vpow.pop %v1070
    %v1072 = vadd.f32 %v1071, 1.0
    %v1073 = vrcp.pop %v1072
    %v1074 = vmul.f32 1.0, %v1073
    %v1075 = vtanh.pop %v1068
    %v1076 = vmul.f32 %v1074, %v986
    %1078 = vrot.lane.b32.xlu0 %v1075, 64
    %v1079 = vpop.permute.xlu0 %1078
    %v1081 = vmul.f32 %v1074, %v1079
    %1083 = vrot.lane.b32.xlu0 %v1081, 32
    %v1084 = vpop.permute.xlu0 %1083
    %v1086 = vadd.f32 %v1076, %v1084
    %v1087 = vtanh.pop %v1086
    %1089 = vrot.lane.b32.xlu0 %v1087, 64
    %v1090 = vpop.permute.xlu0 %1089
    %v1092 = vmul.f32 %v1074, %v1090
    %1094 = vrot.lane.b32.xlu0 %v1092, 32
    %v1095 = vpop.permute.xlu0 %1094
    %v1096 = vsel %vm173, %v1095, 0
    %1098 = vmatprep.subr.mxu0 0.0
    %1099 = vmatpush1.msra.mxu0 0.0
    %1100 = vmatprep.subr.mxu0 0.0
    %1101 = vmatpush1.msra.mxu0 0.0
    %1102 = vmatprep.subr.mxu0 0.0
    %1103 = vmatpush1.msra.mxu0 0.0
    %1104 = vmatprep.subr.mxu0 0.0
    %1105 = vmatpush1.msra.mxu0 0.0
    %1106 = vmatprep.subr.mxu0 0.0
    %1107 = vmatpush1.msra.mxu0 0.0
    %1108 = vmatprep.subr.mxu0 0.0
    %1109 = vmatpush1.msra.mxu0 0.0
    %1110 = vmatprep.subr.mxu0 0.0
    %1111 = vmatpush1.msra.mxu0 0.0
    %1112 = vmatprep.subr.mxu0 0.0
    %1113 = vmatpush1.msra.mxu0 0.0
    %1114 = vmatprep.subr.mxu0 0.0
    %1115 = vmatpush1.msra.mxu0 0.0
    %1116 = vmatprep.subr.mxu0 0.0
    %1117 = vmatpush1.msra.mxu0 0.0
    %1118 = vmatprep.subr.mxu0 0.0
    %1119 = vmatpush1.msra.mxu0 0.0
    %1120 = vmatprep.subr.mxu0 0.0
    %1121 = vmatpush1.msra.mxu0 0.0
    %1122 = vmatprep.subr.mxu0 0.0
    %1123 = vmatpush1.msra.mxu0 %v53
    %1124 = vmatprep.subr.mxu0 0.0
    %1125 = vmatpush1.msra.mxu0 %v52
    %1126 = vmatprep.subr.mxu0 0.0
    %1127 = vmatpush1.msra.mxu0 %v51
    %1128 = vmatprep.subr.mxu0 0.0
    %1129 = vmatpush1.msra.mxu0 %v50
    %1130 = vmatprep.subr.mxu0 0.0
    %1131 = vmatpush2.msra.mxu0 0.0
    %1132 = vmatprep.subr.mxu0 0.0
    %1133 = vmatpush2.msra.mxu0 0.0
    %1134 = vmatprep.subr.mxu0 0.0
    %1135 = vmatpush2.msra.mxu0 0.0
    %1136 = vmatprep.subr.mxu0 0.0
    %1137 = vmatpush2.msra.mxu0 0.0
    %1138 = vmatprep.subr.mxu0 0.0
    %1139 = vmatpush2.msra.mxu0 0.0
    %1140 = vmatprep.subr.mxu0 0.0
    %1141 = vmatpush2.msra.mxu0 0.0
    %1142 = vmatprep.subr.mxu0 0.0
    %1143 = vmatpush2.msra.mxu0 0.0
    %1144 = vmatprep.subr.mxu0 0.0
    %1145 = vmatpush2.msra.mxu0 0.0
    %1146 = vmatprep.subr.mxu0 0.0
    %1147 = vmatpush2.msra.mxu0 0.0
    %1148 = vmatprep.subr.mxu0 0.0
    %1149 = vmatpush2.msra.mxu0 0.0
    %1150 = vmatprep.subr.mxu0 0.0
    %1151 = vmatpush2.msra.mxu0 0.0
    %1152 = vmatprep.subr.mxu0 0.0
    %1153 = vmatpush2.msra.mxu0 0.0
    %1154 = vmatprep.subr.mxu0 0.0
    %1155 = vmatpush2.msra.mxu0 0.0
    %1156 = vmatprep.subr.mxu0 0.0
    %1157 = vmatpush2.msra.mxu0 0.0
    %1158 = vmatprep.subr.mxu0 0.0
    %1159 = vmatpush2.msra.mxu0 0.0
    %1160 = vmatprep.subr.mxu0 0.0
    %1161 = vmatpush2.msra.mxu0 0.0
    %1162 = vmatprep.mubr.f32.mxu0 0.0
    %1163 = vmatmul.mubr.f32.gmra.mxu0 %v1096
    %v1164 = vpop.f32.mrf.mxu0
    %v1165 = vadd.f32 0.0, %v1164
    %v1166 = vpop.f32.mrf.mxu0
    %1167 = vdwg.mxu0
    %v1168 = vadd.f32 %v777, %v1165
    %v1169 = vxor.u32 %v1168, 2147483648
    %v1170 = vmul.f32 %v1169, 1.442695
    %v1171 = vpow.pop %v1170
    %v1172 = vadd.f32 %v1171, 1.0
    %v1173 = vrcp.pop %v1172
    %v1174 = vmul.f32 1.0, %v1173
    %v1175 = vtanh.pop %v1168
    %v1176 = vmul.f32 %v1174, %v1086
    %1178 = vrot.lane.b32.xlu0 %v1175, 64
    %v1179 = vpop.permute.xlu0 %1178
    %v1181 = vmul.f32 %v1174, %v1179
    %1183 = vrot.lane.b32.xlu0 %v1181, 32
    %v1184 = vpop.permute.xlu0 %1183
    %v1186 = vadd.f32 %v1176, %v1184
    %v1187 = vtanh.pop %v1186
    %1189 = vrot.lane.b32.xlu0 %v1187, 64
    %v1190 = vpop.permute.xlu0 %1189
    %v1192 = vmul.f32 %v1174, %v1190
    %1194 = vrot.lane.b32.xlu0 %v1192, 32
    %v1195 = vpop.permute.xlu0 %1194
    %v1196 = vsel %vm173, %v1195, 0
    %1198 = vmatprep.subr.mxu0 0.0
    %1199 = vmatpush1.msra.mxu0 0.0
    %1200 = vmatprep.subr.mxu0 0.0
    %1201 = vmatpush1.msra.mxu0 0.0
    %1202 = vmatprep.subr.mxu0 0.0
    %1203 = vmatpush1.msra.mxu0 0.0
    %1204 = vmatprep.subr.mxu0 0.0
    %1205 = vmatpush1.msra.mxu0 0.0
    %1206 = vmatprep.subr.mxu0 0.0
    %1207 = vmatpush1.msra.mxu0 0.0
    %1208 = vmatprep.subr.mxu0 0.0
    %1209 = vmatpush1.msra.mxu0 0.0
    %1210 = vmatprep.subr.mxu0 0.0
    %1211 = vmatpush1.msra.mxu0 0.0
    %1212 = vmatprep.subr.mxu0 0.0
    %1213 = vmatpush1.msra.mxu0 0.0
    %1214 = vmatprep.subr.mxu0 0.0
    %1215 = vmatpush1.msra.mxu0 0.0
    %1216 = vmatprep.subr.mxu0 0.0
    %1217 = vmatpush1.msra.mxu0 0.0
    %1218 = vmatprep.subr.mxu0 0.0
    %1219 = vmatpush1.msra.mxu0 0.0
    %1220 = vmatprep.subr.mxu0 0.0
    %1221 = vmatpush1.msra.mxu0 0.0
    %1222 = vmatprep.subr.mxu0 0.0
    %1223 = vmatpush1.msra.mxu0 %v53
    %1224 = vmatprep.subr.mxu0 0.0
    %1225 = vmatpush1.msra.mxu0 %v52
    %1226 = vmatprep.subr.mxu0 0.0
    %1227 = vmatpush1.msra.mxu0 %v51
    %1228 = vmatprep.subr.mxu0 0.0
    %1229 = vmatpush1.msra.mxu0 %v50
    %1230 = vmatprep.subr.mxu0 0.0
    %1231 = vmatpush2.msra.mxu0 0.0
    %1232 = vmatprep.subr.mxu0 0.0
    %1233 = vmatpush2.msra.mxu0 0.0
    %1234 = vmatprep.subr.mxu0 0.0
    %1235 = vmatpush2.msra.mxu0 0.0
    %1236 = vmatprep.subr.mxu0 0.0
    %1237 = vmatpush2.msra.mxu0 0.0
    %1238 = vmatprep.subr.mxu0 0.0
    %1239 = vmatpush2.msra.mxu0 0.0
    %1240 = vmatprep.subr.mxu0 0.0
    %1241 = vmatpush2.msra.mxu0 0.0
    %1242 = vmatprep.subr.mxu0 0.0
    %1243 = vmatpush2.msra.mxu0 0.0
    %1244 = vmatprep.subr.mxu0 0.0
    %1245 = vmatpush2.msra.mxu0 0.0
    %1246 = vmatprep.subr.mxu0 0.0
    %1247 = vmatpush2.msra.mxu0 0.0
    %1248 = vmatprep.subr.mxu0 0.0
    %1249 = vmatpush2.msra.mxu0 0.0
    %1250 = vmatprep.subr.mxu0 0.0
    %1251 = vmatpush2.msra.mxu0 0.0
    %1252 = vmatprep.subr.mxu0 0.0
    %1253 = vmatpush2.msra.mxu0 0.0
    %1254 = vmatprep.subr.mxu0 0.0
    %1255 = vmatpush2.msra.mxu0 0.0
    %1256 = vmatprep.subr.mxu0 0.0
    %1257 = vmatpush2.msra.mxu0 0.0
    %1258 = vmatprep.subr.mxu0 0.0
    %1259 = vmatpush2.msra.mxu0 0.0
    %1260 = vmatprep.subr.mxu0 0.0
    %1261 = vmatpush2.msra.mxu0 0.0
    %1262 = vmatprep.mubr.f32.mxu0 0.0
    %1263 = vmatmul.mubr.f32.gmra.mxu0 %v1196
    %v1264 = vpop.f32.mrf.mxu0
    %v1265 = vadd.f32 0.0, %v1264
    %v1266 = vpop.f32.mrf.mxu0
    %1267 = vdwg.mxu0
    %v1268 = vadd.f32 %v782, %v1265
    %v1269 = vxor.u32 %v1268, 2147483648
    %v1270 = vmul.f32 %v1269, 1.442695
    %v1271 = vpow.pop %v1270
    %v1272 = vadd.f32 %v1271, 1.0
    %v1273 = vrcp.pop %v1272
    %v1274 = vmul.f32 1.0, %v1273
    %v1275 = vtanh.pop %v1268
    %v1276 = vmul.f32 %v1274, %v1186
    %1278 = vrot.lane.b32.xlu0 %v1275, 64
    %v1279 = vpop.permute.xlu0 %1278
    %v1281 = vmul.f32 %v1274, %v1279
    %1283 = vrot.lane.b32.xlu0 %v1281, 32
    %v1284 = vpop.permute.xlu0 %1283
    %v1286 = vadd.f32 %v1276, %v1284
    %v1287 = vtanh.pop %v1286
    %1289 = vrot.lane.b32.xlu0 %v1287, 64
    %v1290 = vpop.permute.xlu0 %1289
    %v1292 = vmul.f32 %v1274, %v1290
    %1294 = vrot.lane.b32.xlu0 %v1292, 32
    %v1295 = vpop.permute.xlu0 %1294
    %v1296 = vsel %vm173, %v1295, 0
    %1298 = vmatprep.subr.mxu0 0.0
    %1299 = vmatpush1.msra.mxu0 0.0
    %1300 = vmatprep.subr.mxu0 0.0
    %1301 = vmatpush1.msra.mxu0 0.0
    %1302 = vmatprep.subr.mxu0 0.0
    %1303 = vmatpush1.msra.mxu0 0.0
    %1304 = vmatprep.subr.mxu0 0.0
    %1305 = vmatpush1.msra.mxu0 0.0
    %1306 = vmatprep.subr.mxu0 0.0
    %1307 = vmatpush1.msra.mxu0 0.0
    %1308 = vmatprep.subr.mxu0 0.0
    %1309 = vmatpush1.msra.mxu0 0.0
    %1310 = vmatprep.subr.mxu0 0.0
    %1311 = vmatpush1.msra.mxu0 0.0
    %1312 = vmatprep.subr.mxu0 0.0
    %1313 = vmatpush1.msra.mxu0 0.0
    %1314 = vmatprep.subr.mxu0 0.0
    %1315 = vmatpush1.msra.mxu0 0.0
    %1316 = vmatprep.subr.mxu0 0.0
    %1317 = vmatpush1.msra.mxu0 0.0
    %1318 = vmatprep.subr.mxu0 0.0
    %1319 = vmatpush1.msra.mxu0 0.0
    %1320 = vmatprep.subr.mxu0 0.0
    %1321 = vmatpush1.msra.mxu0 0.0
    %1322 = vmatprep.subr.mxu0 0.0
    %1323 = vmatpush1.msra.mxu0 %v53
    %1324 = vmatprep.subr.mxu0 0.0
    %1325 = vmatpush1.msra.mxu0 %v52
    %1326 = vmatprep.subr.mxu0 0.0
    %1327 = vmatpush1.msra.mxu0 %v51
    %1328 = vmatprep.subr.mxu0 0.0
    %1329 = vmatpush1.msra.mxu0 %v50
    %1330 = vmatprep.subr.mxu0 0.0
    %1331 = vmatpush2.msra.mxu0 0.0
    %1332 = vmatprep.subr.mxu0 0.0
    %1333 = vmatpush2.msra.mxu0 0.0
    %1334 = vmatprep.subr.mxu0 0.0
    %1335 = vmatpush2.msra.mxu0 0.0
    %1336 = vmatprep.subr.mxu0 0.0
    %1337 = vmatpush2.msra.mxu0 0.0
    %1338 = vmatprep.subr.mxu0 0.0
    %1339 = vmatpush2.msra.mxu0 0.0
    %1340 = vmatprep.subr.mxu0 0.0
    %1341 = vmatpush2.msra.mxu0 0.0
    %1342 = vmatprep.subr.mxu0 0.0
    %1343 = vmatpush2.msra.mxu0 0.0
    %1344 = vmatprep.subr.mxu0 0.0
    %1345 = vmatpush2.msra.mxu0 0.0
    %1346 = vmatprep.subr.mxu0 0.0
    %1347 = vmatpush2.msra.mxu0 0.0
    %1348 = vmatprep.subr.mxu0 0.0
    %1349 = vmatpush2.msra.mxu0 0.0
    %1350 = vmatprep.subr.mxu0 0.0
    %1351 = vmatpush2.msra.mxu0 0.0
    %1352 = vmatprep.subr.mxu0 0.0
    %1353 = vmatpush2.msra.mxu0 0.0
    %1354 = vmatprep.subr.mxu0 0.0
    %1355 = vmatpush2.msra.mxu0 0.0
    %1356 = vmatprep.subr.mxu0 0.0
    %1357 = vmatpush2.msra.mxu0 0.0
    %1358 = vmatprep.subr.mxu0 0.0
    %1359 = vmatpush2.msra.mxu0 0.0
    %1360 = vmatprep.subr.mxu0 0.0
    %1361 = vmatpush2.msra.mxu0 0.0
    %1362 = vmatprep.mubr.f32.mxu0 0.0
    %1363 = vmatmul.mubr.f32.gmra.mxu0 %v1296
    %v1364 = vpop.f32.mrf.mxu0
    %v1365 = vadd.f32 0.0, %v1364
    %v1366 = vpop.f32.mrf.mxu0
    %1367 = vdwg.mxu0
    %v1368 = vadd.f32 %v787, %v1365
    %v1369 = vxor.u32 %v1368, 2147483648
    %v1370 = vmul.f32 %v1369, 1.442695
    %v1371 = vpow.pop %v1370
    %v1372 = vadd.f32 %v1371, 1.0
    %v1373 = vrcp.pop %v1372
    %v1374 = vmul.f32 1.0, %v1373
    %v1375 = vtanh.pop %v1368
    %v1376 = vmul.f32 %v1374, %v1286
    %1378 = vrot.lane.b32.xlu0 %v1375, 64
    %v1379 = vpop.permute.xlu0 %1378
    %v1381 = vmul.f32 %v1374, %v1379
    %1383 = vrot.lane.b32.xlu0 %v1381, 32
    %v1384 = vpop.permute.xlu0 %1383
    %v1386 = vadd.f32 %v1376, %v1384
    %v1387 = vtanh.pop %v1386
    %1389 = vrot.lane.b32.xlu0 %v1387, 64
    %v1390 = vpop.permute.xlu0 %1389
    %v1392 = vmul.f32 %v1374, %v1390
    %1394 = vrot.lane.b32.xlu0 %v1392, 32
    %v1395 = vpop.permute.xlu0 %1394
    %v1396 = vsel %vm173, %v1395, 0
    %1398 = vmatprep.subr.mxu0 0.0
    %1399 = vmatpush1.msra.mxu0 0.0
    %1400 = vmatprep.subr.mxu0 0.0
    %1401 = vmatpush1.msra.mxu0 0.0
    %1402 = vmatprep.subr.mxu0 0.0
    %1403 = vmatpush1.msra.mxu0 0.0
    %1404 = vmatprep.subr.mxu0 0.0
    %1405 = vmatpush1.msra.mxu0 0.0
    %1406 = vmatprep.subr.mxu0 0.0
    %1407 = vmatpush1.msra.mxu0 0.0
    %1408 = vmatprep.subr.mxu0 0.0
    %1409 = vmatpush1.msra.mxu0 0.0
    %1410 = vmatprep.subr.mxu0 0.0
    %1411 = vmatpush1.msra.mxu0 0.0
    %1412 = vmatprep.subr.mxu0 0.0
    %1413 = vmatpush1.msra.mxu0 0.0
    %1414 = vmatprep.subr.mxu0 0.0
    %1415 = vmatpush1.msra.mxu0 0.0
    %1416 = vmatprep.subr.mxu0 0.0
    %1417 = vmatpush1.msra.mxu0 0.0
    %1418 = vmatprep.subr.mxu0 0.0
    %1419 = vmatpush1.msra.mxu0 0.0
    %1420 = vmatprep.subr.mxu0 0.0
    %1421 = vmatpush1.msra.mxu0 0.0
    %1422 = vmatprep.subr.mxu0 0.0
    %1423 = vmatpush1.msra.mxu0 %v53
    %1424 = vmatprep.subr.mxu0 0.0
    %1425 = vmatpush1.msra.mxu0 %v52
    %1426 = vmatprep.subr.mxu0 0.0
    %1427 = vmatpush1.msra.mxu0 %v51
    %1428 = vmatprep.subr.mxu0 0.0
    %1429 = vmatpush1.msra.mxu0 %v50
    %1430 = vmatprep.subr.mxu0 0.0
    %1431 = vmatpush2.msra.mxu0 0.0
    %1432 = vmatprep.subr.mxu0 0.0
    %1433 = vmatpush2.msra.mxu0 0.0
    %1434 = vmatprep.subr.mxu0 0.0
    %1435 = vmatpush2.msra.mxu0 0.0
    %1436 = vmatprep.subr.mxu0 0.0
    %1437 = vmatpush2.msra.mxu0 0.0
    %1438 = vmatprep.subr.mxu0 0.0
    %1439 = vmatpush2.msra.mxu0 0.0
    %1440 = vmatprep.subr.mxu0 0.0
    %1441 = vmatpush2.msra.mxu0 0.0
    %1442 = vmatprep.subr.mxu0 0.0
    %1443 = vmatpush2.msra.mxu0 0.0
    %1444 = vmatprep.subr.mxu0 0.0
    %1445 = vmatpush2.msra.mxu0 0.0
    %1446 = vmatprep.subr.mxu0 0.0
    %1447 = vmatpush2.msra.mxu0 0.0
    %1448 = vmatprep.subr.mxu0 0.0
    %1449 = vmatpush2.msra.mxu0 0.0
    %1450 = vmatprep.subr.mxu0 0.0
    %1451 = vmatpush2.msra.mxu0 0.0
    %1452 = vmatprep.subr.mxu0 0.0
    %1453 = vmatpush2.msra.mxu0 0.0
    %1454 = vmatprep.subr.mxu0 0.0
    %1455 = vmatpush2.msra.mxu0 0.0
    %1456 = vmatprep.subr.mxu0 0.0
    %1457 = vmatpush2.msra.mxu0 0.0
    %1458 = vmatprep.subr.mxu0 0.0
    %1459 = vmatpush2.msra.mxu0 0.0
    %1460 = vmatprep.subr.mxu0 0.0
    %1461 = vmatpush2.msra.mxu0 0.0
    %1462 = vmatprep.mubr.f32.mxu0 0.0
    %1463 = vmatmul.mubr.f32.gmra.mxu0 %v1396
    %v1464 = vpop.f32.mrf.mxu0
    %v1465 = vadd.f32 0.0, %v1464
    %v1466 = vpop.f32.mrf.mxu0
    %1467 = vdwg.mxu0
    %v1468 = vadd.f32 %v792, %v1465
    %v1469 = vxor.u32 %v1468, 2147483648
    %v1470 = vmul.f32 %v1469, 1.442695
    %v1471 = vpow.pop %v1470
    %v1472 = vadd.f32 %v1471, 1.0
    %v1473 = vrcp.pop %v1472
    %v1474 = vmul.f32 1.0, %v1473
    %v1475 = vtanh.pop %v1468
    %v1476 = vmul.f32 %v1474, %v1386
    %1478 = vrot.lane.b32.xlu0 %v1475, 64
    %v1479 = vpop.permute.xlu0 %1478
    %v1481 = vmul.f32 %v1474, %v1479
    %1483 = vrot.lane.b32.xlu0 %v1481, 32
    %v1484 = vpop.permute.xlu0 %1483
    %v1486 = vadd.f32 %v1476, %v1484
    %v1487 = vtanh.pop %v1486
    %1489 = vrot.lane.b32.xlu0 %v1487, 64
    %v1490 = vpop.permute.xlu0 %1489
    %v1492 = vmul.f32 %v1474, %v1490
    %1494 = vrot.lane.b32.xlu0 %v1492, 32
    %v1495 = vpop.permute.xlu0 %1494
    %v1496 = vsel %vm173, %v1495, 0
    %1498 = vmatprep.subr.mxu0 0.0
    %1499 = vmatpush1.msra.mxu0 0.0
    %1500 = vmatprep.subr.mxu0 0.0
    %1501 = vmatpush1.msra.mxu0 0.0
    %1502 = vmatprep.subr.mxu0 0.0
    %1503 = vmatpush1.msra.mxu0 0.0
    %1504 = vmatprep.subr.mxu0 0.0
    %1505 = vmatpush1.msra.mxu0 0.0
    %1506 = vmatprep.subr.mxu0 0.0
    %1507 = vmatpush1.msra.mxu0 0.0
    %1508 = vmatprep.subr.mxu0 0.0
    %1509 = vmatpush1.msra.mxu0 0.0
    %1510 = vmatprep.subr.mxu0 0.0
    %1511 = vmatpush1.msra.mxu0 0.0
    %1512 = vmatprep.subr.mxu0 0.0
    %1513 = vmatpush1.msra.mxu0 0.0
    %1514 = vmatprep.subr.mxu0 0.0
    %1515 = vmatpush1.msra.mxu0 0.0
    %1516 = vmatprep.subr.mxu0 0.0
    %1517 = vmatpush1.msra.mxu0 0.0
    %1518 = vmatprep.subr.mxu0 0.0
    %1519 = vmatpush1.msra.mxu0 0.0
    %1520 = vmatprep.subr.mxu0 0.0
    %1521 = vmatpush1.msra.mxu0 0.0
    %1522 = vmatprep.subr.mxu0 0.0
    %1523 = vmatpush1.msra.mxu0 %v53
    %1524 = vmatprep.subr.mxu0 0.0
    %1525 = vmatpush1.msra.mxu0 %v52
    %1526 = vmatprep.subr.mxu0 0.0
    %1527 = vmatpush1.msra.mxu0 %v51
    %1528 = vmatprep.subr.mxu0 0.0
    %1529 = vmatpush1.msra.mxu0 %v50
    %1530 = vmatprep.subr.mxu0 0.0
    %1531 = vmatpush2.msra.mxu0 0.0
    %1532 = vmatprep.subr.mxu0 0.0
    %1533 = vmatpush2.msra.mxu0 0.0
    %1534 = vmatprep.subr.mxu0 0.0
    %1535 = vmatpush2.msra.mxu0 0.0
    %1536 = vmatprep.subr.mxu0 0.0
    %1537 = vmatpush2.msra.mxu0 0.0
    %1538 = vmatprep.subr.mxu0 0.0
    %1539 = vmatpush2.msra.mxu0 0.0
    %1540 = vmatprep.subr.mxu0 0.0
    %1541 = vmatpush2.msra.mxu0 0.0
    %1542 = vmatprep.subr.mxu0 0.0
    %1543 = vmatpush2.msra.mxu0 0.0
    %1544 = vmatprep.subr.mxu0 0.0
    %1545 = vmatpush2.msra.mxu0 0.0
    %1546 = vmatprep.subr.mxu0 0.0
    %1547 = vmatpush2.msra.mxu0 0.0
    %1548 = vmatprep.subr.mxu0 0.0
    %1549 = vmatpush2.msra.mxu0 0.0
    %1550 = vmatprep.subr.mxu0 0.0
    %1551 = vmatpush2.msra.mxu0 0.0
    %1552 = vmatprep.subr.mxu0 0.0
    %1553 = vmatpush2.msra.mxu0 0.0
    %1554 = vmatprep.subr.mxu0 0.0
    %1555 = vmatpush2.msra.mxu0 0.0
    %1556 = vmatprep.subr.mxu0 0.0
    %1557 = vmatpush2.msra.mxu0 0.0
    %1558 = vmatprep.subr.mxu0 0.0
    %1559 = vmatpush2.msra.mxu0 0.0
    %1560 = vmatprep.subr.mxu0 0.0
    %1561 = vmatpush2.msra.mxu0 0.0
    %1562 = vmatprep.mubr.f32.mxu0 0.0
    %1563 = vmatmul.mubr.f32.gmra.mxu0 %v1496
    %v1564 = vpop.f32.mrf.mxu0
    %v1565 = vadd.f32 0.0, %v1564
    %v1566 = vpop.f32.mrf.mxu0
    %1567 = vdwg.mxu0
    %v1568 = vadd.f32 %v797, %v1565
    %v1569 = vxor.u32 %v1568, 2147483648
    %v1570 = vmul.f32 %v1569, 1.442695
    %v1571 = vpow.pop %v1570
    %v1572 = vadd.f32 %v1571, 1.0
    %v1573 = vrcp.pop %v1572
    %v1574 = vmul.f32 1.0, %v1573
    %v1575 = vtanh.pop %v1568
    %v1576 = vmul.f32 %v1574, %v1486
    %1578 = vrot.lane.b32.xlu0 %v1575, 64
    %v1579 = vpop.permute.xlu0 %1578
    %v1581 = vmul.f32 %v1574, %v1579
    %1583 = vrot.lane.b32.xlu0 %v1581, 32
    %v1584 = vpop.permute.xlu0 %1583
    %v1586 = vadd.f32 %v1576, %v1584
    %v1587 = vtanh.pop %v1586
    %1589 = vrot.lane.b32.xlu0 %v1587, 64
    %v1590 = vpop.permute.xlu0 %1589
    %v1592 = vmul.f32 %v1574, %v1590
    %v1593 = vlaneseq
    %v1594 = vshrl.u32 %v1593, 7
    %v1595 = vsub.s32 4, %v1594
    %v1596 = vrot.slane %v54, %v1595
    %1598 = vrot.lane.b32.xlu0 %v1592, 32
    %v1599 = vpop.permute.xlu0 %1598
    %v1600 = vsel %vm173, %v1599, 0
    %1602 = vmatprep.subr.mxu0 0.0
    %1603 = vmatpush1.msra.mxu0 0.0
    %1604 = vmatprep.subr.mxu0 0.0
    %1605 = vmatpush1.msra.mxu0 0.0
    %1606 = vmatprep.subr.mxu0 0.0
    %1607 = vmatpush1.msra.mxu0 0.0
    %1608 = vmatprep.subr.mxu0 0.0
    %1609 = vmatpush1.msra.mxu0 0.0
    %1610 = vmatprep.subr.mxu0 0.0
    %1611 = vmatpush1.msra.mxu0 0.0
    %1612 = vmatprep.subr.mxu0 0.0
    %1613 = vmatpush1.msra.mxu0 0.0
    %1614 = vmatprep.subr.mxu0 0.0
    %1615 = vmatpush1.msra.mxu0 0.0
    %1616 = vmatprep.subr.mxu0 0.0
    %1617 = vmatpush1.msra.mxu0 0.0
    %1618 = vmatprep.subr.mxu0 0.0
    %1619 = vmatpush1.msra.mxu0 0.0
    %1620 = vmatprep.subr.mxu0 0.0
    %1621 = vmatpush1.msra.mxu0 0.0
    %1622 = vmatprep.subr.mxu0 0.0
    %1623 = vmatpush1.msra.mxu0 0.0
    %1624 = vmatprep.subr.mxu0 0.0
    %1625 = vmatpush1.msra.mxu0 0.0
    %1626 = vmatprep.subr.mxu0 0.0
    %1627 = vmatpush1.msra.mxu0 %v75
    %1628 = vmatprep.subr.mxu0 0.0
    %1629 = vmatpush1.msra.mxu0 %v74
    %1630 = vmatprep.subr.mxu0 0.0
    %1631 = vmatpush1.msra.mxu0 %v73
    %1632 = vmatprep.subr.mxu0 0.0
    %1633 = vmatpush1.msra.mxu0 %v72
    %1634 = vmatprep.subr.mxu0 0.0
    %1635 = vmatpush2.msra.mxu0 0.0
    %1636 = vmatprep.subr.mxu0 0.0
    %1637 = vmatpush2.msra.mxu0 0.0
    %1638 = vmatprep.subr.mxu0 0.0
    %1639 = vmatpush2.msra.mxu0 0.0
    %1640 = vmatprep.subr.mxu0 0.0
    %1641 = vmatpush2.msra.mxu0 0.0
    %1642 = vmatprep.subr.mxu0 0.0
    %1643 = vmatpush2.msra.mxu0 0.0
    %1644 = vmatprep.subr.mxu0 0.0
    %1645 = vmatpush2.msra.mxu0 0.0
    %1646 = vmatprep.subr.mxu0 0.0
    %1647 = vmatpush2.msra.mxu0 0.0
    %1648 = vmatprep.subr.mxu0 0.0
    %1649 = vmatpush2.msra.mxu0 0.0
    %1650 = vmatprep.subr.mxu0 0.0
    %1651 = vmatpush2.msra.mxu0 0.0
    %1652 = vmatprep.subr.mxu0 0.0
    %1653 = vmatpush2.msra.mxu0 0.0
    %1654 = vmatprep.subr.mxu0 0.0
    %1655 = vmatpush2.msra.mxu0 0.0
    %1656 = vmatprep.subr.mxu0 0.0
    %1657 = vmatpush2.msra.mxu0 0.0
    %1658 = vmatprep.subr.mxu0 0.0
    %1659 = vmatpush2.msra.mxu0 0.0
    %1660 = vmatprep.subr.mxu0 0.0
    %1661 = vmatpush2.msra.mxu0 0.0
    %1662 = vmatprep.subr.mxu0 0.0
    %1663 = vmatpush2.msra.mxu0 0.0
    %1664 = vmatprep.subr.mxu0 0.0
    %1665 = vmatpush2.msra.mxu0 0.0
    %1666 = vmatprep.mubr.f32.mxu0 0.0
    %1667 = vmatmul.mubr.f32.gmra.mxu0 %v1600
    %v1668 = vpop.f32.mrf.mxu0
    %v1669 = vadd.f32 %v1596, %v1668
    %v1670 = vpop.f32.mrf.mxu0
    %1671 = vdwg.mxu0
    %vm1672 = vcmask 25600
    %1673 = vst.msk [vmem:[#allocation7] sm:$0x3] %vm1672, %v1669
    // Predicated region
    $region26: #{tpu_custom_call.1} parent=1 // pred_check
      _
    $region27: #{tpu_custom_call.1} parent=1 // pred_check_branch
      %1675 = sbr.rel (0) target = $region29
    $region28: #{tpu_custom_call.1} parent=1 // pred_region
      %s1677 = ssub.s32 32, 32
      %1678 = vsyncadd [#allocation4], %s1677
      %s1680 = sshll.u32 [#allocation7], 4
      %s1681 = int_to_ptr.vmem [resolvable:$true] %s1680
      %1683 = dma.vmem_to_hbm [thread:$0]  %s1681, 32, %s4, [#allocation4]
    $region29: #{tpu_custom_call.1} parent=1 // pred_fallthru
      _
    // Predicated region
    $region30: #{tpu_custom_call.1} parent=1 // pred_check
      _
    $region31: #{tpu_custom_call.1} parent=1 // pred_check_branch
      %1685 = sbr.rel (0) target = $region33
    $region32: #{tpu_custom_call.1} parent=1 // pred_region
      %1686 = dma.done [#allocation4], 32
    $region33: #{tpu_custom_call.1} parent=1 // pred_fallthru
      _
    %1687 = vsyncpa [#allocation3], 1
    %1688 = vsyncpa [#allocation6], 1
    %1689 = vsyncpa [#allocation4], 1

</llo_original>
